<compile_context>
chip_gen: v6e
topology: v6e:2x2x1
jax: 0.10.0
libtpu: 0.0.40
codegen_flags: <defaults>
</compile_context>

<pallas_src>
import numpy as np
import jax
import jax.numpy as jnp
from jax.experimental import pallas as pl
from jax.experimental.pallas import tpu as pltpu

FREQ_BANDS = {
    "delta": (1, 4), "theta": (4, 8), "alpha": (8, 13),
    "beta": (13, 30), "gamma": (30, 100), "high_gamma": (100, 200),
}
SPECIFIC_FREQS = {
    "schumann": 7.83, "healing": 528, "solfeggio": 396, "sleep": 2.5,
    "focus": 14.1, "harmony": 432, "meditation": 6.0, "energy": 30.0,
}


def init_params(key):
    """Deterministic stand-in for the module's __init__ parameters."""
    ks = jax.random.split(key, 7)
    return {
        "band_weights": {b: jnp.float32(0.5) for b in FREQ_BANDS},
        "freq_weights": {f: jnp.float32(0.3) for f in SPECIFIC_FREQS},
        "harmonic_progression": jax.random.normal(ks[0], (8, 4), jnp.float32),
        # time_modulation: Linear(1,32) -> ReLU -> Linear(32,16) -> ReLU -> Linear(16,8)
        "w1": 0.3 * jax.random.normal(ks[1], (32, 1), jnp.float32),
        "b1": 0.1 * jax.random.normal(ks[2], (32,), jnp.float32),
        "w2": 0.3 * jax.random.normal(ks[3], (16, 32), jnp.float32),
        "b2": 0.1 * jax.random.normal(ks[4], (16,), jnp.float32),
        "w3": 0.3 * jax.random.normal(ks[5], (8, 16), jnp.float32),
        "b3": 0.1 * jax.random.normal(ks[6], (8,), jnp.float32),
    }


def _progression_mean(params, length, output_size):
    # TODO(synk): the reference get_harmonic_progression() is ill-formed for the
    # vector t = arange(L) it is called with (torch.tensor([tensor]) and
    # mod_params[0, 1] on a 1-D MLP output both raise); we implement the evident
    # per-timestep intent and take the mean, which is the only quantity the
    # forward pass actually consumes.
    t = jnp.arange(length, dtype=jnp.float32)
    tn = (t / output_size)[:, None]                                   # (L, 1)
    h = jax.nn.relu(tn @ params["w1"].T + params["b1"])
    h = jax.nn.relu(h @ params["w2"].T + params["b2"])
    mod_params = h @ params["w3"].T + params["b3"]                    # (L, 8)
    mod_depth = mod_params[0, 1]
    chord_idx = jnp.floor(t / output_size * 8.0).astype(jnp.int32) % 8
    chord = params["harmonic_progression"][chord_idx]                 # (L, 4)
    chord = chord * (1.0 + mod_depth * jnp.sin(2.0 * np.pi * t / output_size))[:, None]
    return jnp.mean(chord)


def _round_up(v, m):
    return ((v + m - 1) // m) * m


def frequency_modulation_forward(x, params, *, sample_rate=22050, output_size=None):
    B, C, L = x.shape
    if output_size is None:
        output_size = L
    n_fft = 1 << int(np.ceil(np.log2(L)))
    F = n_fft // 2 + 1
    # The reference forward broadcasts an F-length spectral mask against an
    # L-length time modulation vector; that is only well-defined (and only
    # runs in PyTorch) when L == n_fft//2 + 1, so we require the same.
    assert L == F, "actual_length must equal n_fft//2 + 1 (e.g. 129, 257, ...)"

    Fpad = _round_up(F, 128)   # lane-dense frequency axis
    Lpad = _round_up(L, 128)   # lane-dense time axis

    freqs = np.arange(F, dtype=np.float64) * sample_rate / n_fft
    t_idx = np.arange(L, dtype=np.float64)

    # ---- spectral gain = prod_r (1 + coef_r * profile_r[k]) -----------------
    profiles, coefs = [], []
    for band, (low, high) in FREQ_BANDS.items():
        center = (low + high) / 2.0
        width = (high - low) / 2.0
        mask = np.exp(-0.5 * ((freqs - center) / (width / 2.0)) ** 2)
        mask = np.where(freqs < low, 0.0, mask)
        mask = np.where(freqs > high, 0.0, mask)
        if np.any(mask > 0.01):                      # static decision (freqs only)
            time_mod = np.sin(2.0 * np.pi * center * t_idx / sample_rate)
            profiles.append((mask * (1.0 + 0.2 * time_mod)).astype(np.float32))
            coefs.append(jnp.asarray(params["band_weights"][band], jnp.float32))

    prog_mean = _progression_mean(params, L, output_size)
    window_size = min(15, n_fft // 100)
    if window_size == 0:
        window_size = 1
    for name, f0 in SPECIFIC_FREQS.items():
        if f0 >= sample_rate / 2:
            continue
        for m in (1.0, 2.0, 3.0, 4.0, 5.0):
            hf = f0 * m
            if hf >= sample_rate / 2:
                continue
            h_idx = int(np.argmin(np.abs(freqs - hf)))
            start = max(0, h_idx - window_size)
            end = min(F - 1, h_idx + window_size)
            if start >= end:
                continue
            idxs = np.arange(start, end + 1, dtype=np.float64)
            window = np.exp(-0.5 * ((idxs - h_idx) / (window_size / 3.0)) ** 2)
            prof = np.zeros(F, dtype=np.float32)
            prof[start:end + 1] = window.astype(np.float32)
            strength = 1.0 / m ** 1.2
            coefs.append(jnp.asarray(params["freq_weights"][name], jnp.float32)
                         * np.float32(strength) * (1.0 + prog_mean))
            profiles.append(prof)

    # Fold the multiplicative gain into the forward DFT matrix (exact: the gain
    # is data-independent), with an identity fast path if nothing passed the
    # static band/harmonic filters.
    if profiles:
        profiles_a = jnp.asarray(np.stack(profiles, axis=0))          # (P, F)
        coefs_a = jnp.stack([jnp.reshape(c, ()) for c in coefs])      # (P,)
        gain = jnp.prod(1.0 + coefs_a[:, None] * profiles_a, axis=0)  # (F,)
    else:
        gain = jnp.ones((F,), jnp.float32)
    gain_p = jnp.pad(gain.astype(jnp.float32), (0, Fpad - F))         # (Fpad,)

    # ---- static DFT / inverse-DFT matrices (lane-padded) ---------------------
    # TODO(synk): rfft/irfft have no Pallas primitive; realized as real-DFT matmuls.
    # TODO(synk): peel the trailing (2^k + 1)-th sample / Nyquist bin out of the
    # matmuls via a rank-1 correction to recover the ~4x padding waste at small L.
    n = np.arange(L, dtype=np.float64)[:, None]
    k = np.arange(F, dtype=np.float64)[None, :]
    theta = 2.0 * np.pi * n * k / n_fft
    cfwd = np.zeros((Lpad, Fpad), np.float32)
    cfwd[:L, :F] = np.cos(theta)                      # X_re = x @ cfwd
    sfwd_neg = np.zeros((Lpad, Fpad), np.float32)
    sfwd_neg[:L, :F] = -np.sin(theta)                 # X_im = x @ (-sin)
    w = np.full(F, 2.0, dtype=np.float64)
    w[0] = 1.0
    w[-1] = 1.0
    theta_i = (2.0 * np.pi * np.arange(F, dtype=np.float64)[:, None]
               * np.arange(L, dtype=np.float64)[None, :] / n_fft)
    cinv = np.zeros((Fpad, Lpad), np.float32)
    cinv[:F, :L] = (w[:, None] * np.cos(theta_i) / n_fft)
    sinv = np.zeros((Fpad, Lpad), np.float32)
    sinv[:F, :L] = (-w[:, None] * np.sin(theta_i) / n_fft)

    # Fused forward matrix with the spectral gain baked in: (Lpad, 2*Fpad), bf16
    # operands (f32 accumulation on the MXU).
    fwd = jnp.concatenate(
        [jnp.asarray(cfwd) * gain_p[None, :],
         jnp.asarray(sfwd_neg) * gain_p[None, :]], axis=1).astype(jnp.bfloat16)
    # Fused inverse matrix (cos & sin halves stacked along K -> ONE matmul).
    inv = jnp.asarray(np.concatenate([cinv, sinv], axis=0)).astype(jnp.bfloat16)

    # 3-tap smoother lane weights: interior 0.7/0.15/0.15, endpoints passthrough,
    # padded lanes zeroed — replaces the in-kernel iota/compare/select chain.
    wc = np.zeros((1, Fpad), np.float32)
    wl = np.zeros((1, Fpad), np.float32)
    wr = np.zeros((1, Fpad), np.float32)
    wc[0, 0] = 1.0
    wc[0, F - 1] = 1.0
    if F > 2:
        wc[0, 1:F - 1] = 0.7
        wl[0, 1:F - 1] = 0.15
        wr[0, 1:F - 1] = 0.15
    wc_j, wl_j, wr_j = jnp.asarray(wc), jnp.asarray(wl), jnp.asarray(wr)

    # ---- row tiling / grid ----------------------------------------------------
    rows = x.reshape(B * C, L).astype(jnp.bfloat16)   # bf16 row tiles -> bf16 MXU
    R = B * C
    TR = 256                                  # row-tile; keeps MXU fed for big B*C
    Rp = _round_up(R, 16)                     # bf16 sublane packing => multiples of 16
    if Rp <= TR:
        if Rp >= 32:
            # Give a 2-TensorCore chip (v7x) at least two row tiles to shard.
            TR = _round_up((Rp + 1) // 2, 16)
            Rp = _round_up(Rp, TR)
        else:
            TR = Rp
    else:
        Rp = _round_up(R, TR)

    def vmem_need(tr, nbuf_resident):
        resident = nbuf_resident * (Lpad * 2 * Fpad * 2        # fwd (bf16)
                                    + 2 * Fpad * Lpad * 2      # inv (bf16)
                                    + 3 * Fpad * 4)            # smoother weights
        pipelined = 2 * tr * Lpad * 2 + 2 * tr * Lpad * 4      # rows + out, double-buffered
        temps = 8 * tr * Fpad * 4 + 2 * tr * 2 * Fpad * 2      # spec/mag/sm/ratio + bf16 copy
        return resident + pipelined + temps

    try:
        vmem_phys = int(pltpu.get_tpu_info().vmem_capacity_bytes)
    except Exception:
        vmem_phys = 64 << 20                  # conservative: smallest generation (v7x)
    vmem_cap = max(32 << 20, int(vmem_phys * 0.8))   # ~51 MiB v7x, ~102 MiB v5e/v6e

    if TR > 128 and vmem_need(TR, 2) > vmem_cap:
        TR = 128                              # halves live temporaries, same MXU occupancy
        Rp = _round_up(R, TR)
    # TODO(synk): for very large L (n_fft >= 4096) the resident DFT matrices alone
    # exceed v7x VMEM; that needs a frequency-tiled "arbitrary" reduction grid with
    # an accumulator scratch instead of full matrix residency.
    vmem_limit = int(min(max(vmem_need(TR, 2) + (4 << 20), 32 << 20), vmem_cap))

    rows = jnp.pad(rows, ((0, Rp - R), (0, Lpad - L)))
    grid = (Rp // TR,)

    def kernel(x_ref, fwd_ref, inv_ref, wc_ref, wl_ref, wr_ref, out_ref):
        xv = x_ref[...]                                               # (TR, Lpad) bf16
        # fused forward real DFT (spectral gain pre-folded into the matrix)
        spec = jnp.dot(xv, fwd_ref[...], preferred_element_type=jnp.float32)
        x_re = spec[:, :Fpad]                                         # tile-aligned slices
        x_im = spec[:, Fpad:]
        mag = jnp.sqrt(x_re * x_re + x_im * x_im)
        # 3-tap magnitude smoother: XLU rolls + precomputed lane weights
        # (endpoint passthrough / padded-lane zeroing encoded in the weights).
        mag_s = (wc_ref[...] * mag
                 + wl_ref[...] * pltpu.roll(mag, shift=1, axis=1)
                 + wr_ref[...] * pltpu.roll(mag, shift=Fpad - 1, axis=1))
        # phase-preserving rescale; approximate reciprocal runs on the idle EUP.
        # TODO(synk): the reference emits `mag_s + 0j` at exactly-zero bins; with the
        # nz-select folded into the ratio that measure-zero case maps to 0 here.
        denom = jnp.where(mag > 1e-20, mag, 1.0)
        ratio = mag_s * pl.reciprocal(denom, approx=True)
        scaled = spec * jnp.concatenate([ratio, ratio], axis=1)       # (TR, 2*Fpad)
        # single fused inverse real DFT (cos & sin halves stacked along K)
        out_ref[...] = jnp.dot(scaled.astype(jnp.bfloat16), inv_ref[...],
                               preferred_element_type=jnp.float32)

    def run(single_buffer):
        def resident(shape):
            if single_buffer:
                # Constant index_map: a second pipeline buffer is useless; single-buffer it.
                return pl.BlockSpec(shape, lambda i: (0, 0),
                                    pipeline_mode=pl.Buffered(1))
            return pl.BlockSpec(shape, lambda i: (0, 0))

        return pl.pallas_call(
            kernel,
            out_shape=jax.ShapeDtypeStruct((Rp, Lpad), jnp.float32),
            grid=grid,
            in_specs=[
                pl.BlockSpec((TR, Lpad), lambda i: (i, 0)),   # rows (pipelined)
                resident((Lpad, 2 * Fpad)),                   # fused fwd DFT (resident)
                resident((2 * Fpad, Lpad)),                   # fused inverse DFT (resident)
                resident((1, Fpad)),                          # smoother center weights
                resident((1, Fpad)),                          # smoother left weights
                resident((1, Fpad)),                          # smoother right weights
            ],
            out_specs=pl.BlockSpec((TR, Lpad), lambda i: (i, 0)),
            compiler_params=pltpu.CompilerParams(
                dimension_semantics=("parallel",),
                vmem_limit_bytes=vmem_limit),
        )(rows, fwd, inv, wc_j, wl_j, wr_j)

    try:
        out = run(single_buffer=True)
    except Exception:
        # Fallback if this backend rejects pipeline_mode=pl.Buffered(1).
        out = run(single_buffer=False)

    return out[:R, :L].reshape(B, C, L)


if __name__ == "__main__":
    B, C = 2, 2
    L = 129          # => n_fft = 256, rfft bins F = 129 == L (required by the reference)
    key = jax.random.PRNGKey(0)
    kx, kp = jax.random.split(key)
    x = jax.random.normal(kx, (B, C, L), dtype=jnp.float32)
    params = init_params(kp)
    y = frequency_modulation_forward(x, params, sample_rate=22050, output_size=L)
    jax.block_until_ready(y)
    assert y.shape == x.shape and y.dtype == jnp.float32
    assert bool(jnp.all(jnp.isfinite(y)))
    print("KERNEL_OK")
</pallas_src>

<mosaic_0001>
module attributes {stable_mosaic.version = 11 : i64} {
  func.func @kernel(%arg0: i32, %arg1: memref<16x256xbf16, #tpu.memory_space<vmem>>, %arg2: memref<256x512xbf16, #tpu.memory_space<vmem>>, %arg3: memref<512x256xbf16, #tpu.memory_space<vmem>>, %arg4: memref<1x256xf32, #tpu.memory_space<vmem>>, %arg5: memref<1x256xf32, #tpu.memory_space<vmem>>, %arg6: memref<1x256xf32, #tpu.memory_space<vmem>>, %arg7: memref<16x256xf32, #tpu.memory_space<vmem>>) attributes {dimension_semantics = [#tpu.dimension_semantics<parallel>], iteration_bounds = array<i64: 1>, scalar_prefetch = 0 : i64, scratch_operands = 0 : i64, tpu.core_type = #tpu.core_type<tc>, window_params = [{transform_indices = @transform_0, window_bounds = array<i64: 16, 256>}, {pipeline_mode = #tpu.pipeline_mode<synchronous>, transform_indices = @transform_1, window_bounds = array<i64: 256, 512>}, {pipeline_mode = #tpu.pipeline_mode<synchronous>, transform_indices = @transform_2, window_bounds = array<i64: 512, 256>}, {pipeline_mode = #tpu.pipeline_mode<synchronous>, transform_indices = @transform_3, window_bounds = array<i64: 1, 256>}, {pipeline_mode = #tpu.pipeline_mode<synchronous>, transform_indices = @transform_4, window_bounds = array<i64: 1, 256>}, {pipeline_mode = #tpu.pipeline_mode<synchronous>, transform_indices = @transform_5, window_bounds = array<i64: 1, 256>}, {transform_indices = @transform_6, window_bounds = array<i64: 16, 256>}]} {
    %c0 = arith.constant 0 : index
    %c0_0 = arith.constant 0 : index
    %0 = vector.load %arg1[%c0, %c0_0] : memref<16x256xbf16, #tpu.memory_space<vmem>>, vector<16x256xbf16>
    %c0_1 = arith.constant 0 : index
    %c0_2 = arith.constant 0 : index
    %1 = vector.load %arg2[%c0_1, %c0_2] : memref<256x512xbf16, #tpu.memory_space<vmem>>, vector<256x512xbf16>
    %cst = arith.constant dense<0.000000e+00> : vector<16x512xf32>
    %2 = tpu.matmul %0, %1, %cst {dimension_numbers = #tpu.dot_dimension_numbers<[1], [0], [0], [1], [0, 0, 1, 1], [], []>} : vector<16x256xbf16>, vector<256x512xbf16>, vector<16x512xf32> -> vector<16x512xf32>
    %3 = vector.extract_strided_slice %2 {offsets = [0, 0], sizes = [16, 256], strides = [1, 1]} : vector<16x512xf32> to vector<16x256xf32>
    %4 = vector.extract_strided_slice %2 {offsets = [0, 256], sizes = [16, 256], strides = [1, 1]} : vector<16x512xf32> to vector<16x256xf32>
    %5 = arith.mulf %3, %3 : vector<16x256xf32>
    %6 = arith.mulf %4, %4 : vector<16x256xf32>
    %7 = arith.addf %5, %6 : vector<16x256xf32>
    %8 = math.sqrt %7 : vector<16x256xf32>
    %c0_3 = arith.constant 0 : index
    %c0_4 = arith.constant 0 : index
    %9 = vector.load %arg4[%c0_3, %c0_4] : memref<1x256xf32, #tpu.memory_space<vmem>>, vector<1x256xf32>
    %10 = vector.broadcast %9 : vector<1x256xf32> to vector<16x256xf32>
    %11 = arith.mulf %10, %8 : vector<16x256xf32>
    %c0_5 = arith.constant 0 : index
    %c0_6 = arith.constant 0 : index
    %12 = vector.load %arg5[%c0_5, %c0_6] : memref<1x256xf32, #tpu.memory_space<vmem>>, vector<1x256xf32>
    %c1_i32 = arith.constant 1 : i32
    %13 = tpu.dynamic_rotate %8 by %c1_i32 dim 1 : vector<16x256xf32>, i32 -> vector<16x256xf32>
    %14 = vector.broadcast %12 : vector<1x256xf32> to vector<16x256xf32>
    %15 = arith.mulf %14, %13 : vector<16x256xf32>
    %16 = arith.addf %11, %15 : vector<16x256xf32>
    %c0_7 = arith.constant 0 : index
    %c0_8 = arith.constant 0 : index
    %17 = vector.load %arg6[%c0_7, %c0_8] : memref<1x256xf32, #tpu.memory_space<vmem>>, vector<1x256xf32>
    %c255_i32 = arith.constant 255 : i32
    %18 = tpu.dynamic_rotate %8 by %c255_i32 dim 1 : vector<16x256xf32>, i32 -> vector<16x256xf32>
    %19 = vector.broadcast %17 : vector<1x256xf32> to vector<16x256xf32>
    %20 = arith.mulf %19, %18 : vector<16x256xf32>
    %21 = arith.addf %16, %20 : vector<16x256xf32>
    %cst_9 = arith.constant 9.99999968E-21 : f32
    %22 = vector.broadcast %cst_9 : f32 to vector<16x256xf32>
    %23 = arith.cmpf ogt, %8, %22 : vector<16x256xf32>
    %cst_10 = arith.constant 1.000000e+00 : f32
    %24 = vector.broadcast %cst_10 : f32 to vector<16x256xf32>
    %25 = arith.select %23, %8, %24 : vector<16x256xi1>, vector<16x256xf32>
    %26 = tpu.reciprocal %25 {approx = true} : vector<16x256xf32> -> vector<16x256xf32>
    %27 = arith.mulf %21, %26 : vector<16x256xf32>
    %28 = tpu.concatenate %27, %27 in 1 : vector<16x256xf32>, vector<16x256xf32> -> vector<16x512xf32>
    %29 = arith.mulf %2, %28 : vector<16x512xf32>
    %30 = arith.truncf %29 : vector<16x512xf32> to vector<16x512xbf16>
    %c0_11 = arith.constant 0 : index
    %c0_12 = arith.constant 0 : index
    %31 = vector.load %arg3[%c0_11, %c0_12] : memref<512x256xbf16, #tpu.memory_space<vmem>>, vector<512x256xbf16>
    %cst_13 = arith.constant dense<0.000000e+00> : vector<16x256xf32>
    %32 = tpu.matmul %30, %31, %cst_13 {dimension_numbers = #tpu.dot_dimension_numbers<[1], [0], [0], [1], [0, 0, 1, 1], [], []>} : vector<16x512xbf16>, vector<512x256xbf16>, vector<16x256xf32> -> vector<16x256xf32>
    %c0_14 = arith.constant 0 : index
    %c0_15 = arith.constant 0 : index
    %33 = vector.load %arg7[%c0_14, %c0_15] : memref<16x256xf32, #tpu.memory_space<vmem>>, vector<16x256xf32>
    tpu.vector_store %arg7[%c0_14, %c0_15], %32 {strides = array<i32>} : memref<16x256xf32, #tpu.memory_space<vmem>>, vector<16x256xf32>,
    return
  }
  func.func @transform_0(%arg0: i32) -> (i32, i32) {
    %c0_i32 = arith.constant 0 : i32
    %c0_i32_0 = arith.constant 0 : i32
    return %arg0, %c0_i32 : i32, i32
  }
  func.func @transform_1(%arg0: i32) -> (i32, i32) {
    %c0_i32 = arith.constant 0 : i32
    %c0_i32_0 = arith.constant 0 : i32
    %c0_i32_1 = arith.constant 0 : i32
    return %c0_i32, %c0_i32_0 : i32, i32
  }
  func.func @transform_2(%arg0: i32) -> (i32, i32) {
    %c0_i32 = arith.constant 0 : i32
    %c0_i32_0 = arith.constant 0 : i32
    %c0_i32_1 = arith.constant 0 : i32
    return %c0_i32, %c0_i32_0 : i32, i32
  }
  func.func @transform_3(%arg0: i32) -> (i32, i32) {
    %c0_i32 = arith.constant 0 : i32
    %c0_i32_0 = arith.constant 0 : i32
    %c0_i32_1 = arith.constant 0 : i32
    return %c0_i32, %c0_i32_0 : i32, i32
  }
  func.func @transform_4(%arg0: i32) -> (i32, i32) {
    %c0_i32 = arith.constant 0 : i32
    %c0_i32_0 = arith.constant 0 : i32
    %c0_i32_1 = arith.constant 0 : i32
    return %c0_i32, %c0_i32_0 : i32, i32
  }
  func.func @transform_5(%arg0: i32) -> (i32, i32) {
    %c0_i32 = arith.constant 0 : i32
    %c0_i32_0 = arith.constant 0 : i32
    %c0_i32_1 = arith.constant 0 : i32
    return %c0_i32, %c0_i32_0 : i32, i32
  }
  func.func @transform_6(%arg0: i32) -> (i32, i32) {
    %c0_i32 = arith.constant 0 : i32
    %c0_i32_0 = arith.constant 0 : i32
    return %arg0, %c0_i32 : i32, i32
  }
}

module attributes {stable_mosaic.version = 11 : i64} {
  func.func @kernel(%arg0: i32, %arg1: memref<16x256xbf16, #tpu.memory_space<vmem>>, %arg2: memref<256x512xbf16, #tpu.memory_space<vmem>>, %arg3: memref<512x256xbf16, #tpu.memory_space<vmem>>, %arg4: memref<1x256xf32, #tpu.memory_space<vmem>>, %arg5: memref<1x256xf32, #tpu.memory_space<vmem>>, %arg6: memref<1x256xf32, #tpu.memory_space<vmem>>, %arg7: memref<16x256xf32, #tpu.memory_space<vmem>>) attributes {dimension_semantics = [#tpu.dimension_semantics<parallel>], iteration_bounds = array<i64: 1>, scalar_prefetch = 0 : i64, scratch_operands = 0 : i64, tpu.core_type = #tpu.core_type<tc>, window_params = [{transform_indices = @transform_0, window_bounds = array<i64: 16, 256>}, {pipeline_mode = #tpu.pipeline_mode<synchronous>, transform_indices = @transform_1, window_bounds = array<i64: 256, 512>}, {pipeline_mode = #tpu.pipeline_mode<synchronous>, transform_indices = @transform_2, window_bounds = array<i64: 512, 256>}, {pipeline_mode = #tpu.pipeline_mode<synchronous>, transform_indices = @transform_3, window_bounds = array<i64: 1, 256>}, {pipeline_mode = #tpu.pipeline_mode<synchronous>, transform_indices = @transform_4, window_bounds = array<i64: 1, 256>}, {pipeline_mode = #tpu.pipeline_mode<synchronous>, transform_indices = @transform_5, window_bounds = array<i64: 1, 256>}, {transform_indices = @transform_6, window_bounds = array<i64: 16, 256>}]} {
    %c0 = arith.constant 0 : index
    %c0_0 = arith.constant 0 : index
    %0 = vector.load %arg1[%c0, %c0_0] : memref<16x256xbf16, #tpu.memory_space<vmem>>, vector<16x256xbf16>
    %c0_1 = arith.constant 0 : index
    %c0_2 = arith.constant 0 : index
    %1 = vector.load %arg2[%c0_1, %c0_2] : memref<256x512xbf16, #tpu.memory_space<vmem>>, vector<256x512xbf16>
    %cst = arith.constant dense<0.000000e+00> : vector<16x512xf32>
    %2 = tpu.matmul %0, %1, %cst {dimension_numbers = #tpu.dot_dimension_numbers<[1], [0], [0], [1], [0, 0, 1, 1], [], []>} : vector<16x256xbf16>, vector<256x512xbf16>, vector<16x512xf32> -> vector<16x512xf32>
    %3 = vector.extract_strided_slice %2 {offsets = [0, 0], sizes = [16, 256], strides = [1, 1]} : vector<16x512xf32> to vector<16x256xf32>
    %4 = vector.extract_strided_slice %2 {offsets = [0, 256], sizes = [16, 256], strides = [1, 1]} : vector<16x512xf32> to vector<16x256xf32>
    %5 = arith.mulf %3, %3 : vector<16x256xf32>
    %6 = arith.mulf %4, %4 : vector<16x256xf32>
    %7 = arith.addf %5, %6 : vector<16x256xf32>
    %8 = math.sqrt %7 : vector<16x256xf32>
    %c0_3 = arith.constant 0 : index
    %c0_4 = arith.constant 0 : index
    %9 = vector.load %arg4[%c0_3, %c0_4] : memref<1x256xf32, #tpu.memory_space<vmem>>, vector<1x256xf32>
    %10 = vector.broadcast %9 : vector<1x256xf32> to vector<16x256xf32>
    %11 = arith.mulf %10, %8 : vector<16x256xf32>
    %c0_5 = arith.constant 0 : index
    %c0_6 = arith.constant 0 : index
    %12 = vector.load %arg5[%c0_5, %c0_6] : memref<1x256xf32, #tpu.memory_space<vmem>>, vector<1x256xf32>
    %c1_i32 = arith.constant 1 : i32
    %13 = tpu.dynamic_rotate %8 by %c1_i32 dim 1 : vector<16x256xf32>, i32 -> vector<16x256xf32>
    %14 = vector.broadcast %12 : vector<1x256xf32> to vector<16x256xf32>
    %15 = arith.mulf %14, %13 : vector<16x256xf32>
    %16 = arith.addf %11, %15 : vector<16x256xf32>
    %c0_7 = arith.constant 0 : index
    %c0_8 = arith.constant 0 : index
    %17 = vector.load %arg6[%c0_7, %c0_8] : memref<1x256xf32, #tpu.memory_space<vmem>>, vector<1x256xf32>
    %c255_i32 = arith.constant 255 : i32
    %18 = tpu.dynamic_rotate %8 by %c255_i32 dim 1 : vector<16x256xf32>, i32 -> vector<16x256xf32>
    %19 = vector.broadcast %17 : vector<1x256xf32> to vector<16x256xf32>
    %20 = arith.mulf %19, %18 : vector<16x256xf32>
    %21 = arith.addf %16, %20 : vector<16x256xf32>
    %cst_9 = arith.constant 9.99999968E-21 : f32
    %22 = vector.broadcast %cst_9 : f32 to vector<16x256xf32>
    %23 = arith.cmpf ogt, %8, %22 : vector<16x256xf32>
    %cst_10 = arith.constant 1.000000e+00 : f32
    %24 = vector.broadcast %cst_10 : f32 to vector<16x256xf32>
    %25 = arith.select %23, %8, %24 : vector<16x256xi1>, vector<16x256xf32>
    %26 = tpu.reciprocal %25 {approx = true} : vector<16x256xf32> -> vector<16x256xf32>
    %27 = arith.mulf %21, %26 : vector<16x256xf32>
    %28 = tpu.concatenate %27, %27 in 1 : vector<16x256xf32>, vector<16x256xf32> -> vector<16x512xf32>
    %29 = arith.mulf %2, %28 : vector<16x512xf32>
    %30 = arith.truncf %29 : vector<16x512xf32> to vector<16x512xbf16>
    %c0_11 = arith.constant 0 : index
    %c0_12 = arith.constant 0 : index
    %31 = vector.load %arg3[%c0_11, %c0_12] : memref<512x256xbf16, #tpu.memory_space<vmem>>, vector<512x256xbf16>
    %cst_13 = arith.constant dense<0.000000e+00> : vector<16x256xf32>
    %32 = tpu.matmul %30, %31, %cst_13 {dimension_numbers = #tpu.dot_dimension_numbers<[1], [0], [0], [1], [0, 0, 1, 1], [], []>} : vector<16x512xbf16>, vector<512x256xbf16>, vector<16x256xf32> -> vector<16x256xf32>
    %c0_14 = arith.constant 0 : index
    %c0_15 = arith.constant 0 : index
    %33 = vector.load %arg7[%c0_14, %c0_15] : memref<16x256xf32, #tpu.memory_space<vmem>>, vector<16x256xf32>
    tpu.vector_store %arg7[%c0_14, %c0_15], %32 {strides = array<i32>} : memref<16x256xf32, #tpu.memory_space<vmem>>, vector<16x256xf32>,
    return
  }
  func.func @transform_0(%arg0: i32) -> (i32, i32) {
    %c0_i32 = arith.constant 0 : i32
    %c0_i32_0 = arith.constant 0 : i32
    return %arg0, %c0_i32 : i32, i32
  }
  func.func @transform_1(%arg0: i32) -> (i32, i32) {
    %c0_i32 = arith.constant 0 : i32
    %c0_i32_0 = arith.constant 0 : i32
    %c0_i32_1 = arith.constant 0 : i32
    return %c0_i32, %c0_i32_0 : i32, i32
  }
  func.func @transform_2(%arg0: i32) -> (i32, i32) {
    %c0_i32 = arith.constant 0 : i32
    %c0_i32_0 = arith.constant 0 : i32
    %c0_i32_1 = arith.constant 0 : i32
    return %c0_i32, %c0_i32_0 : i32, i32
  }
  func.func @transform_3(%arg0: i32) -> (i32, i32) {
    %c0_i32 = arith.constant 0 : i32
    %c0_i32_0 = arith.constant 0 : i32
    %c0_i32_1 = arith.constant 0 : i32
    return %c0_i32, %c0_i32_0 : i32, i32
  }
  func.func @transform_4(%arg0: i32) -> (i32, i32) {
    %c0_i32 = arith.constant 0 : i32
    %c0_i32_0 = arith.constant 0 : i32
    %c0_i32_1 = arith.constant 0 : i32
    return %c0_i32, %c0_i32_0 : i32, i32
  }
  func.func @transform_5(%arg0: i32) -> (i32, i32) {
    %c0_i32 = arith.constant 0 : i32
    %c0_i32_0 = arith.constant 0 : i32
    %c0_i32_1 = arith.constant 0 : i32
    return %c0_i32, %c0_i32_0 : i32, i32
  }
  func.func @transform_6(%arg0: i32) -> (i32, i32) {
    %c0_i32 = arith.constant 0 : i32
    %c0_i32_0 = arith.constant 0 : i32
    return %arg0, %c0_i32 : i32, i32
  }
}

</mosaic_0001>

<llo_original>
// kernel: tpu_custom_call.1
$region0: #{tpu_custom_call.1}
  #allocation0 [shape = 'u32[]', space=smem, size = 0x4, offset = 0x4, fixed_abs, tag = 'smem constant byte address 0x4 - core index']
  #allocation1 [shape = 'u32[144,128]{1,0:T(1,128)}', space=vmem, size = 0x12000, scoped, tag = 'internal scratch']
  %s0 = inlined_call_operand.hbm [shape: bf16[16,256], index: 0, kind: input, shape index: {}]
  %s1 = inlined_call_operand.hbm [shape: bf16[256,512], index: 1, kind: input, shape index: {}]
  %s2 = inlined_call_operand.hbm [shape: bf16[512,256], index: 2, kind: input, shape index: {}]
  %s3 = inlined_call_operand.vmem [shape: f32[1,256], index: 3, kind: input, shape index: {}]
  %s4 = inlined_call_operand.vmem [shape: f32[1,256], index: 4, kind: input, shape index: {}]
  %s5 = inlined_call_operand.vmem [shape: f32[1,256], index: 5, kind: input, shape index: {}]
  %s6 = inlined_call_operand.hbm [shape: f32[16,256], index: 6, kind: output, shape index: {}]
  %s7 = sld [smem:[#allocation0]]
  $region46: #{tpu_custom_call.1} parent=0
    _
  %s9 = ssub.s32 1, %s7
  %s10 = scalar_select 0, %s9, %s7
  $region1: #{tpu_custom_call.1} parent=0
    #allocation2 [shape = 'u8[8192]{0}', space=vmem, size = 0x2000, scoped, tag = 'input window, operand 0, single buffered']
    #allocation3 [shape = 's32[1]{0}', space=sflag, size = 0x4, scoped, tag = 'scoped memory for tpu_custom_call.1']
    #allocation4 [shape = 's32[1]{0}', space=sflag, size = 0x4, scoped, tag = 'scoped memory for tpu_custom_call.1']
    #allocation5 [shape = 'u8[262144]{0}', space=vmem, size = 0x40000, scoped, tag = 'input window, operand 1, single buffered']
    #allocation6 [shape = 's32[1]{0}', space=sflag, size = 0x4, scoped, tag = 'scoped memory for tpu_custom_call.1']
    #allocation7 [shape = 'u8[262144]{0}', space=vmem, size = 0x40000, scoped, tag = 'input window, operand 2, single buffered']
    #allocation8 [shape = 'u8[16384]{0}', space=vmem, size = 0x4000, scoped, tag = 'output window, operand 0, single buffered']
    %11 = vsyncpa [#allocation3], 0
    %12 = vsyncpa [#allocation6], 0
    %13 = vsyncpa [#allocation4], 0
    // Predicated region
    $region2: #{tpu_custom_call.1} parent=1 // pred_check
      _
    $region3: #{tpu_custom_call.1} parent=1 // pred_check_branch
      %15 = sbr.rel (0) target = $region5
    $region4: #{tpu_custom_call.1} parent=1 // pred_region
      %s17 = ssub.s32 256, 256
      %18 = vsyncadd [#allocation3], %s17
      %s19 = sshll.u32 [#allocation2], 4
      %s20 = int_to_ptr.vmem [resolvable:$true] %s19
      %25 = dma.hbm_to_vmem [thread:$0]  %s0, 256, %s20, [#allocation3], 128, 128, 8
    $region5: #{tpu_custom_call.1} parent=1 // pred_fallthru
      _
    // Predicated region
    $region6: #{tpu_custom_call.1} parent=1 // pred_check
      _
    $region7: #{tpu_custom_call.1} parent=1 // pred_check_branch
      %27 = sbr.rel (0) target = $region9
    $region8: #{tpu_custom_call.1} parent=1 // pred_region
      %s29 = ssub.s32 8192, 8192
      %30 = vsyncadd [#allocation6], %s29
      %s31 = sshll.u32 [#allocation5], 4
      %s32 = int_to_ptr.vmem [resolvable:$true] %s31
      %37 = dma.hbm_to_vmem [thread:$0]  %s1, 8192, %s32, [#allocation6], 256, 256, 16
    $region9: #{tpu_custom_call.1} parent=1 // pred_fallthru
      _
    // Predicated region
    $region10: #{tpu_custom_call.1} parent=1 // pred_check
      _
    $region11: #{tpu_custom_call.1} parent=1 // pred_check_branch
      %39 = sbr.rel (0) target = $region13
    $region12: #{tpu_custom_call.1} parent=1 // pred_region
      %s41 = ssub.s32 8192, 8192
      %42 = vsyncadd [#allocation6], %s41
      %s43 = sshll.u32 [#allocation7], 4
      %s44 = int_to_ptr.vmem [resolvable:$true] %s43
      %49 = dma.hbm_to_vmem [thread:$0]  %s2, 8192, %s44, [#allocation6], 128, 128, 8
    $region13: #{tpu_custom_call.1} parent=1 // pred_fallthru
      _
    // Predicated region
    $region14: #{tpu_custom_call.1} parent=1 // pred_check
      _
    $region15: #{tpu_custom_call.1} parent=1 // pred_check_branch
      %51 = sbr.rel (0) target = $region17
    $region16: #{tpu_custom_call.1} parent=1 // pred_region
      _
    $region17: #{tpu_custom_call.1} parent=1 // pred_fallthru
      _
    // Predicated region
    $region18: #{tpu_custom_call.1} parent=1 // pred_check
      _
    $region19: #{tpu_custom_call.1} parent=1 // pred_check_branch
      %53 = sbr.rel (0) target = $region21
    $region20: #{tpu_custom_call.1} parent=1 // pred_region
      _
    $region21: #{tpu_custom_call.1} parent=1 // pred_fallthru
      _
    // Predicated region
    $region22: #{tpu_custom_call.1} parent=1 // pred_check
      _
    $region23: #{tpu_custom_call.1} parent=1 // pred_check_branch
      %55 = sbr.rel (0) target = $region25
    $region24: #{tpu_custom_call.1} parent=1 // pred_region
      _
    $region25: #{tpu_custom_call.1} parent=1 // pred_fallthru
      _
    // Predicated region
    $region26: #{tpu_custom_call.1} parent=1 // pred_check
      _
    $region27: #{tpu_custom_call.1} parent=1 // pred_check_branch
      %57 = sbr.rel (0) target = $region29
    $region28: #{tpu_custom_call.1} parent=1 // pred_region
      %58 = dma.done [#allocation3], 256
    $region29: #{tpu_custom_call.1} parent=1 // pred_fallthru
      _
    // Predicated region
    $region30: #{tpu_custom_call.1} parent=1 // pred_check
      _
    $region31: #{tpu_custom_call.1} parent=1 // pred_check_branch
      %60 = sbr.rel (0) target = $region33
    $region32: #{tpu_custom_call.1} parent=1 // pred_region
      %61 = dma.done [#allocation6], 8192
    $region33: #{tpu_custom_call.1} parent=1 // pred_fallthru
      _
    // Predicated region
    $region34: #{tpu_custom_call.1} parent=1 // pred_check
      _
    $region35: #{tpu_custom_call.1} parent=1 // pred_check_branch
      %63 = sbr.rel (0) target = $region37
    $region36: #{tpu_custom_call.1} parent=1 // pred_region
      %64 = dma.done [#allocation6], 8192
    $region37: #{tpu_custom_call.1} parent=1 // pred_fallthru
      _
    %v65 = vld [vmem:[#allocation2] sm:$0xff]
    %v66 = vld [vmem:[#allocation2 + $0x8] sm:$0xff]
    %v67 = vld [vmem:[#allocation5] sm:$0xff]
    %v68 = vld [vmem:[#allocation5 + $0x8] sm:$0xff]
    %v69 = vld [vmem:[#allocation5 + $0x10] sm:$0xff]
    %v70 = vld [vmem:[#allocation5 + $0x18] sm:$0xff]
    %v71 = vld [vmem:[#allocation5 + $0x20] sm:$0xff]
    %v72 = vld [vmem:[#allocation5 + $0x28] sm:$0xff]
    %v73 = vld [vmem:[#allocation5 + $0x30] sm:$0xff]
    %v74 = vld [vmem:[#allocation5 + $0x38] sm:$0xff]
    %v75 = vld [vmem:[#allocation5 + $0x40] sm:$0xff]
    %v76 = vld [vmem:[#allocation5 + $0x48] sm:$0xff]
    %v77 = vld [vmem:[#allocation5 + $0x50] sm:$0xff]
    %v78 = vld [vmem:[#allocation5 + $0x58] sm:$0xff]
    %v79 = vld [vmem:[#allocation5 + $0x60] sm:$0xff]
    %v80 = vld [vmem:[#allocation5 + $0x68] sm:$0xff]
    %v81 = vld [vmem:[#allocation5 + $0x70] sm:$0xff]
    %v82 = vld [vmem:[#allocation5 + $0x78] sm:$0xff]
    %v83 = vld [vmem:[#allocation5 + $0x80] sm:$0xff]
    %v84 = vld [vmem:[#allocation5 + $0x88] sm:$0xff]
    %v85 = vld [vmem:[#allocation5 + $0x90] sm:$0xff]
    %v86 = vld [vmem:[#allocation5 + $0x98] sm:$0xff]
    %v87 = vld [vmem:[#allocation5 + $0xa0] sm:$0xff]
    %v88 = vld [vmem:[#allocation5 + $0xa8] sm:$0xff]
    %v89 = vld [vmem:[#allocation5 + $0xb0] sm:$0xff]
    %v90 = vld [vmem:[#allocation5 + $0xb8] sm:$0xff]
    %v91 = vld [vmem:[#allocation5 + $0xc0] sm:$0xff]
    %v92 = vld [vmem:[#allocation5 + $0xc8] sm:$0xff]
    %v93 = vld [vmem:[#allocation5 + $0xd0] sm:$0xff]
    %v94 = vld [vmem:[#allocation5 + $0xd8] sm:$0xff]
    %v95 = vld [vmem:[#allocation5 + $0xe0] sm:$0xff]
    %v96 = vld [vmem:[#allocation5 + $0xe8] sm:$0xff]
    %v97 = vld [vmem:[#allocation5 + $0xf0] sm:$0xff]
    %v98 = vld [vmem:[#allocation5 + $0xf8] sm:$0xff]
    %v99 = vld [vmem:[#allocation5 + $0x100] sm:$0xff]
    %v100 = vld [vmem:[#allocation5 + $0x108] sm:$0xff]
    %v101 = vld [vmem:[#allocation5 + $0x110] sm:$0xff]
    %v102 = vld [vmem:[#allocation5 + $0x118] sm:$0xff]
    %v103 = vld [vmem:[#allocation5 + $0x120] sm:$0xff]
    %v104 = vld [vmem:[#allocation5 + $0x128] sm:$0xff]
    %v105 = vld [vmem:[#allocation5 + $0x130] sm:$0xff]
    %v106 = vld [vmem:[#allocation5 + $0x138] sm:$0xff]
    %v107 = vld [vmem:[#allocation5 + $0x140] sm:$0xff]
    %v108 = vld [vmem:[#allocation5 + $0x148] sm:$0xff]
    %v109 = vld [vmem:[#allocation5 + $0x150] sm:$0xff]
    %v110 = vld [vmem:[#allocation5 + $0x158] sm:$0xff]
    %v111 = vld [vmem:[#allocation5 + $0x160] sm:$0xff]
    %v112 = vld [vmem:[#allocation5 + $0x168] sm:$0xff]
    %v113 = vld [vmem:[#allocation5 + $0x170] sm:$0xff]
    %v114 = vld [vmem:[#allocation5 + $0x178] sm:$0xff]
    %v115 = vld [vmem:[#allocation5 + $0x180] sm:$0xff]
    %v116 = vld [vmem:[#allocation5 + $0x188] sm:$0xff]
    %v117 = vld [vmem:[#allocation5 + $0x190] sm:$0xff]
    %v118 = vld [vmem:[#allocation5 + $0x198] sm:$0xff]
    %v119 = vld [vmem:[#allocation5 + $0x1a0] sm:$0xff]
    %v120 = vld [vmem:[#allocation5 + $0x1a8] sm:$0xff]
    %v121 = vld [vmem:[#allocation5 + $0x1b0] sm:$0xff]
    %v122 = vld [vmem:[#allocation5 + $0x1b8] sm:$0xff]
    %v123 = vld [vmem:[#allocation5 + $0x1c0] sm:$0xff]
    %v124 = vld [vmem:[#allocation5 + $0x1c8] sm:$0xff]
    %v125 = vld [vmem:[#allocation5 + $0x1d0] sm:$0xff]
    %v126 = vld [vmem:[#allocation5 + $0x1d8] sm:$0xff]
    %v127 = vld [vmem:[#allocation5 + $0x1e0] sm:$0xff]
    %v128 = vld [vmem:[#allocation5 + $0x1e8] sm:$0xff]
    %v129 = vld [vmem:[#allocation5 + $0x1f0] sm:$0xff]
    %v130 = vld [vmem:[#allocation5 + $0x1f8] sm:$0xff]
    %v133 = vunpack.c.l.b16 %v65
    %v134 = vunpack.c.h.b16 %v65
    %v135 = vunpack.c.l.b16 %v66
    %v136 = vunpack.c.h.b16 %v66
    %v137 = vpack.c.b16 %v135, %v133
    %v138 = vpack.c.b16 %v136, %v134
    %v205 = vunpack.c.l.b16 %v67
    %v206 = vunpack.c.h.b16 %v67
    %v207 = vunpack.c.l.b16 %v68
    %v208 = vunpack.c.h.b16 %v68
    %v209 = vunpack.c.l.b16 %v69
    %v210 = vunpack.c.h.b16 %v69
    %v211 = vunpack.c.l.b16 %v70
    %v212 = vunpack.c.h.b16 %v70
    %v213 = vunpack.c.l.b16 %v71
    %v214 = vunpack.c.h.b16 %v71
    %v215 = vunpack.c.l.b16 %v72
    %v216 = vunpack.c.h.b16 %v72
    %v217 = vunpack.c.l.b16 %v73
    %v218 = vunpack.c.h.b16 %v73
    %v219 = vunpack.c.l.b16 %v74
    %v220 = vunpack.c.h.b16 %v74
    %v221 = vunpack.c.l.b16 %v75
    %v222 = vunpack.c.h.b16 %v75
    %v223 = vunpack.c.l.b16 %v76
    %v224 = vunpack.c.h.b16 %v76
    %v225 = vunpack.c.l.b16 %v77
    %v226 = vunpack.c.h.b16 %v77
    %v227 = vunpack.c.l.b16 %v78
    %v228 = vunpack.c.h.b16 %v78
    %v229 = vunpack.c.l.b16 %v79
    %v230 = vunpack.c.h.b16 %v79
    %v231 = vunpack.c.l.b16 %v80
    %v232 = vunpack.c.h.b16 %v80
    %v233 = vunpack.c.l.b16 %v81
    %v234 = vunpack.c.h.b16 %v81
    %v235 = vunpack.c.l.b16 %v82
    %v236 = vunpack.c.h.b16 %v82
    %v237 = vunpack.c.l.b16 %v83
    %v238 = vunpack.c.h.b16 %v83
    %v239 = vunpack.c.l.b16 %v84
    %v240 = vunpack.c.h.b16 %v84
    %v241 = vunpack.c.l.b16 %v85
    %v242 = vunpack.c.h.b16 %v85
    %v243 = vunpack.c.l.b16 %v86
    %v244 = vunpack.c.h.b16 %v86
    %v245 = vunpack.c.l.b16 %v87
    %v246 = vunpack.c.h.b16 %v87
    %v247 = vunpack.c.l.b16 %v88
    %v248 = vunpack.c.h.b16 %v88
    %v249 = vunpack.c.l.b16 %v89
    %v250 = vunpack.c.h.b16 %v89
    %v251 = vunpack.c.l.b16 %v90
    %v252 = vunpack.c.h.b16 %v90
    %v253 = vunpack.c.l.b16 %v91
    %v254 = vunpack.c.h.b16 %v91
    %v255 = vunpack.c.l.b16 %v92
    %v256 = vunpack.c.h.b16 %v92
    %v257 = vunpack.c.l.b16 %v93
    %v258 = vunpack.c.h.b16 %v93
    %v259 = vunpack.c.l.b16 %v94
    %v260 = vunpack.c.h.b16 %v94
    %v261 = vunpack.c.l.b16 %v95
    %v262 = vunpack.c.h.b16 %v95
    %v263 = vunpack.c.l.b16 %v96
    %v264 = vunpack.c.h.b16 %v96
    %v265 = vunpack.c.l.b16 %v97
    %v266 = vunpack.c.h.b16 %v97
    %v267 = vunpack.c.l.b16 %v98
    %v268 = vunpack.c.h.b16 %v98
    %v269 = vunpack.c.l.b16 %v99
    %v270 = vunpack.c.h.b16 %v99
    %v271 = vunpack.c.l.b16 %v100
    %v272 = vunpack.c.h.b16 %v100
    %v273 = vunpack.c.l.b16 %v101
    %v274 = vunpack.c.h.b16 %v101
    %v275 = vunpack.c.l.b16 %v102
    %v276 = vunpack.c.h.b16 %v102
    %v277 = vunpack.c.l.b16 %v103
    %v278 = vunpack.c.h.b16 %v103
    %v279 = vunpack.c.l.b16 %v104
    %v280 = vunpack.c.h.b16 %v104
    %v281 = vunpack.c.l.b16 %v105
    %v282 = vunpack.c.h.b16 %v105
    %v283 = vunpack.c.l.b16 %v106
    %v284 = vunpack.c.h.b16 %v106
    %v285 = vunpack.c.l.b16 %v107
    %v286 = vunpack.c.h.b16 %v107
    %v287 = vunpack.c.l.b16 %v108
    %v288 = vunpack.c.h.b16 %v108
    %v289 = vunpack.c.l.b16 %v109
    %v290 = vunpack.c.h.b16 %v109
    %v291 = vunpack.c.l.b16 %v110
    %v292 = vunpack.c.h.b16 %v110
    %v293 = vunpack.c.l.b16 %v111
    %v294 = vunpack.c.h.b16 %v111
    %v295 = vunpack.c.l.b16 %v112
    %v296 = vunpack.c.h.b16 %v112
    %v297 = vunpack.c.l.b16 %v113
    %v298 = vunpack.c.h.b16 %v113
    %v299 = vunpack.c.l.b16 %v114
    %v300 = vunpack.c.h.b16 %v114
    %v301 = vunpack.c.l.b16 %v115
    %v302 = vunpack.c.h.b16 %v115
    %v303 = vunpack.c.l.b16 %v116
    %v304 = vunpack.c.h.b16 %v116
    %v305 = vunpack.c.l.b16 %v117
    %v306 = vunpack.c.h.b16 %v117
    %v307 = vunpack.c.l.b16 %v118
    %v308 = vunpack.c.h.b16 %v118
    %v309 = vunpack.c.l.b16 %v119
    %v310 = vunpack.c.h.b16 %v119
    %v311 = vunpack.c.l.b16 %v120
    %v312 = vunpack.c.h.b16 %v120
    %v313 = vunpack.c.l.b16 %v121
    %v314 = vunpack.c.h.b16 %v121
    %v315 = vunpack.c.l.b16 %v122
    %v316 = vunpack.c.h.b16 %v122
    %v317 = vunpack.c.l.b16 %v123
    %v318 = vunpack.c.h.b16 %v123
    %v319 = vunpack.c.l.b16 %v124
    %v320 = vunpack.c.h.b16 %v124
    %v321 = vunpack.c.l.b16 %v125
    %v322 = vunpack.c.h.b16 %v125
    %v323 = vunpack.c.l.b16 %v126
    %v324 = vunpack.c.h.b16 %v126
    %v325 = vunpack.c.l.b16 %v127
    %v326 = vunpack.c.h.b16 %v127
    %v327 = vunpack.c.l.b16 %v128
    %v328 = vunpack.c.h.b16 %v128
    %v329 = vunpack.c.l.b16 %v129
    %v330 = vunpack.c.h.b16 %v129
    %v331 = vunpack.c.l.b16 %v130
    %v332 = vunpack.c.h.b16 %v130
    %v333 = vpack.c.b16 %v209, %v205
    %v334 = vpack.c.b16 %v210, %v206
    %v335 = vpack.c.b16 %v211, %v207
    %v336 = vpack.c.b16 %v212, %v208
    %v337 = vpack.c.b16 %v217, %v213
    %v338 = vpack.c.b16 %v218, %v214
    %v339 = vpack.c.b16 %v219, %v215
    %v340 = vpack.c.b16 %v220, %v216
    %v341 = vpack.c.b16 %v225, %v221
    %v342 = vpack.c.b16 %v226, %v222
    %v343 = vpack.c.b16 %v227, %v223
    %v344 = vpack.c.b16 %v228, %v224
    %v345 = vpack.c.b16 %v233, %v229
    %v346 = vpack.c.b16 %v234, %v230
    %v347 = vpack.c.b16 %v235, %v231
    %v348 = vpack.c.b16 %v236, %v232
    %v349 = vpack.c.b16 %v241, %v237
    %v350 = vpack.c.b16 %v242, %v238
    %v351 = vpack.c.b16 %v243, %v239
    %v352 = vpack.c.b16 %v244, %v240
    %v353 = vpack.c.b16 %v249, %v245
    %v354 = vpack.c.b16 %v250, %v246
    %v355 = vpack.c.b16 %v251, %v247
    %v356 = vpack.c.b16 %v252, %v248
    %v357 = vpack.c.b16 %v257, %v253
    %v358 = vpack.c.b16 %v258, %v254
    %v359 = vpack.c.b16 %v259, %v255
    %v360 = vpack.c.b16 %v260, %v256
    %v361 = vpack.c.b16 %v265, %v261
    %v362 = vpack.c.b16 %v266, %v262
    %v363 = vpack.c.b16 %v267, %v263
    %v364 = vpack.c.b16 %v268, %v264
    %v365 = vpack.c.b16 %v273, %v269
    %v366 = vpack.c.b16 %v274, %v270
    %v367 = vpack.c.b16 %v275, %v271
    %v368 = vpack.c.b16 %v276, %v272
    %v369 = vpack.c.b16 %v281, %v277
    %v370 = vpack.c.b16 %v282, %v278
    %v371 = vpack.c.b16 %v283, %v279
    %v372 = vpack.c.b16 %v284, %v280
    %v373 = vpack.c.b16 %v289, %v285
    %v374 = vpack.c.b16 %v290, %v286
    %v375 = vpack.c.b16 %v291, %v287
    %v376 = vpack.c.b16 %v292, %v288
    %v377 = vpack.c.b16 %v297, %v293
    %v378 = vpack.c.b16 %v298, %v294
    %v379 = vpack.c.b16 %v299, %v295
    %v380 = vpack.c.b16 %v300, %v296
    %v381 = vpack.c.b16 %v305, %v301
    %v382 = vpack.c.b16 %v306, %v302
    %v383 = vpack.c.b16 %v307, %v303
    %v384 = vpack.c.b16 %v308, %v304
    %v385 = vpack.c.b16 %v313, %v309
    %v386 = vpack.c.b16 %v314, %v310
    %v387 = vpack.c.b16 %v315, %v311
    %v388 = vpack.c.b16 %v316, %v312
    %v389 = vpack.c.b16 %v321, %v317
    %v390 = vpack.c.b16 %v322, %v318
    %v391 = vpack.c.b16 %v323, %v319
    %v392 = vpack.c.b16 %v324, %v320
    %v393 = vpack.c.b16 %v329, %v325
    %v394 = vpack.c.b16 %v330, %v326
    %v395 = vpack.c.b16 %v331, %v327
    %v396 = vpack.c.b16 %v332, %v328
    %461 = vmatprep.subr.bf16.mxu0 %v362
    %462 = vmatpush1.bf16.msra.mxu0 %v361
    %463 = vmatprep.subr.bf16.mxu0 %v358
    %464 = vmatpush1.bf16.msra.mxu0 %v357
    %465 = vmatprep.subr.bf16.mxu0 %v354
    %466 = vmatpush1.bf16.msra.mxu0 %v353
    %467 = vmatprep.subr.bf16.mxu0 %v350
    %468 = vmatpush1.bf16.msra.mxu0 %v349
    %469 = vmatprep.subr.bf16.mxu0 %v346
    %470 = vmatpush1.bf16.msra.mxu0 %v345
    %471 = vmatprep.subr.bf16.mxu0 %v342
    %472 = vmatpush1.bf16.msra.mxu0 %v341
    %473 = vmatprep.subr.bf16.mxu0 %v338
    %474 = vmatpush1.bf16.msra.mxu0 %v337
    %475 = vmatprep.subr.bf16.mxu0 %v334
    %476 = vmatpush1.bf16.msra.mxu0 %v333
    %477 = vmatprep.subr.bf16.mxu0 %v394
    %478 = vmatpush2.bf16.msra.mxu0 %v393
    %479 = vmatprep.subr.bf16.mxu0 %v390
    %480 = vmatpush2.bf16.msra.mxu0 %v389
    %481 = vmatprep.subr.bf16.mxu0 %v386
    %482 = vmatpush2.bf16.msra.mxu0 %v385
    %483 = vmatprep.subr.bf16.mxu0 %v382
    %484 = vmatpush2.bf16.msra.mxu0 %v381
    %485 = vmatprep.subr.bf16.mxu0 %v378
    %486 = vmatpush2.bf16.msra.mxu0 %v377
    %487 = vmatprep.subr.bf16.mxu0 %v374
    %488 = vmatpush2.bf16.msra.mxu0 %v373
    %489 = vmatprep.subr.bf16.mxu0 %v370
    %490 = vmatpush2.bf16.msra.mxu0 %v369
    %491 = vmatprep.subr.bf16.mxu0 %v366
    %492 = vmatpush2.bf16.msra.mxu0 %v365
    %493 = vmatprep.mubr.bf16.mxu0 %v138
    %494 = vmatmul.mubr.bf16.gmra.mxu0 %v137
    %v495 = vpop.f32.mrf.mxu0
    %v496 = vadd.f32 0.0, %v495
    %v497 = vpop.f32.mrf.mxu0
    %v498 = vadd.f32 0.0, %v497
    %v499 = vpop.f32.mrf.mxu0
    %v500 = vadd.f32 0.0, %v499
    %v501 = vpop.f32.mrf.mxu0
    %v502 = vadd.f32 0.0, %v501
    %503 = vdwg.mxu0
    %504 = vmatprep.subr.bf16.mxu0 %v364
    %505 = vmatpush1.bf16.msra.mxu0 %v363
    %506 = vmatprep.subr.bf16.mxu0 %v360
    %507 = vmatpush1.bf16.msra.mxu0 %v359
    %508 = vmatprep.subr.bf16.mxu0 %v356
    %509 = vmatpush1.bf16.msra.mxu0 %v355
    %510 = vmatprep.subr.bf16.mxu0 %v352
    %511 = vmatpush1.bf16.msra.mxu0 %v351
    %512 = vmatprep.subr.bf16.mxu0 %v348
    %513 = vmatpush1.bf16.msra.mxu0 %v347
    %514 = vmatprep.subr.bf16.mxu0 %v344
    %515 = vmatpush1.bf16.msra.mxu0 %v343
    %516 = vmatprep.subr.bf16.mxu0 %v340
    %517 = vmatpush1.bf16.msra.mxu0 %v339
    %518 = vmatprep.subr.bf16.mxu0 %v336
    %519 = vmatpush1.bf16.msra.mxu0 %v335
    %520 = vmatprep.subr.bf16.mxu0 %v396
    %521 = vmatpush2.bf16.msra.mxu0 %v395
    %522 = vmatprep.subr.bf16.mxu0 %v392
    %523 = vmatpush2.bf16.msra.mxu0 %v391
    %524 = vmatprep.subr.bf16.mxu0 %v388
    %525 = vmatpush2.bf16.msra.mxu0 %v387
    %526 = vmatprep.subr.bf16.mxu0 %v384
    %527 = vmatpush2.bf16.msra.mxu0 %v383
    %528 = vmatprep.subr.bf16.mxu0 %v380
    %529 = vmatpush2.bf16.msra.mxu0 %v379
    %530 = vmatprep.subr.bf16.mxu0 %v376
    %531 = vmatpush2.bf16.msra.mxu0 %v375
    %532 = vmatprep.subr.bf16.mxu0 %v372
    %533 = vmatpush2.bf16.msra.mxu0 %v371
    %534 = vmatprep.subr.bf16.mxu0 %v368
    %535 = vmatpush2.bf16.msra.mxu0 %v367
    %536 = vmatprep.mubr.bf16.mxu0 %v138
    %537 = vmatmul.mubr.bf16.gmra.mxu0 %v137
    %v538 = vpop.f32.mrf.mxu0
    %v539 = vadd.f32 0.0, %v538
    %v540 = vpop.f32.mrf.mxu0
    %v541 = vadd.f32 0.0, %v540
    %v542 = vpop.f32.mrf.mxu0
    %v543 = vadd.f32 0.0, %v542
    %v544 = vpop.f32.mrf.mxu0
    %v545 = vadd.f32 0.0, %v544
    %546 = vdwg.mxu0
    %v547 = vmul.f32 %v496, %v496
    %v548 = vmul.f32 %v498, %v498
    %v549 = vmul.f32 %v500, %v500
    %v550 = vmul.f32 %v502, %v502
    %v551 = vmul.f32 %v539, %v539
    %v552 = vmul.f32 %v541, %v541
    %v553 = vmul.f32 %v543, %v543
    %v554 = vmul.f32 %v545, %v545
    %v555 = vadd.f32 %v547, %v551
    %v556 = vadd.f32 %v548, %v552
    %v557 = vadd.f32 %v549, %v553
    %v558 = vadd.f32 %v550, %v554
    %v559 = vrsqrt.pop %v555
    %v560 = vmul.f32 %v555, %v559
    %vm561 = vcmp.eq.f32.partialorder %v555, inf
    %v562 = vsel %vm561, %v555, %v560
    %vm563 = vcmp.eq.f32.partialorder %v555, 0.0
    %v564 = vand.u32 %v555, 2147483648
    %v565 = vsel %vm563, %v564, %v562
    %v566 = vrsqrt.pop %v556
    %v567 = vmul.f32 %v556, %v566
    %vm568 = vcmp.eq.f32.partialorder %v556, inf
    %v569 = vsel %vm568, %v556, %v567
    %vm570 = vcmp.eq.f32.partialorder %v556, 0.0
    %v571 = vand.u32 %v556, 2147483648
    %v572 = vsel %vm570, %v571, %v569
    %v573 = vrsqrt.pop %v557
    %v574 = vmul.f32 %v557, %v573
    %vm575 = vcmp.eq.f32.partialorder %v557, inf
    %v576 = vsel %vm575, %v557, %v574
    %vm577 = vcmp.eq.f32.partialorder %v557, 0.0
    %v578 = vand.u32 %v557, 2147483648
    %v579 = vsel %vm577, %v578, %v576
    %v580 = vrsqrt.pop %v558
    %v581 = vmul.f32 %v558, %v580
    %vm582 = vcmp.eq.f32.partialorder %v558, inf
    %v583 = vsel %vm582, %v558, %v581
    %vm584 = vcmp.eq.f32.partialorder %v558, 0.0
    %v585 = vand.u32 %v558, 2147483648
    %v586 = vsel %vm584, %v585, %v583
    %v587 = vld [vmem:[%s3] sm:$0x3]
    %v589 = vlaneseq
    %v590 = vshrl.u32 %v589, 7
    %v591 = vsub.s32 0, %v590
    %v592 = vrot.slane %v587, %v591
    %v593 = vlaneseq
    %v594 = vshrl.u32 %v593, 7
    %v595 = vsub.s32 1, %v594
    %v596 = vrot.slane %v587, %v595
    %v599 = vmul.f32 %v592, %v565
    %v600 = vmul.f32 %v596, %v572
    %v601 = vmul.f32 %v592, %v579
    %v602 = vmul.f32 %v596, %v586
    %v603 = vld [vmem:[%s4] sm:$0x3]
    %604 = vrot.lane.b32.xlu0 %v565, 1
    %v605 = vpop.permute.xlu0 %604
    %606 = vrot.lane.b32.xlu0 %v579, 1
    %v607 = vpop.permute.xlu0 %606
    %608 = vrot.lane.b32.xlu0 %v572, 1
    %v609 = vpop.permute.xlu0 %608
    %610 = vrot.lane.b32.xlu0 %v586, 1
    %v611 = vpop.permute.xlu0 %610
    %v612 = vlaneseq
    %v613 = vand.u32 %v612, 127
    %vm614 = vcmp.lt.s32.totalorder %v613, 1
    %v615 = vsel %vm614, %v605, %v609
    %v616 = vsel %vm614, %v607, %v611
    %v617 = vsel %vm614, %v609, %v605
    %v618 = vsel %vm614, %v611, %v607
    %v620 = vlaneseq
    %v621 = vshrl.u32 %v620, 7
    %v622 = vsub.s32 0, %v621
    %v623 = vrot.slane %v603, %v622
    %v624 = vlaneseq
    %v625 = vshrl.u32 %v624, 7
    %v626 = vsub.s32 1, %v625
    %v627 = vrot.slane %v603, %v626
    %v630 = vmul.f32 %v623, %v617
    %v631 = vmul.f32 %v627, %v615
    %v632 = vmul.f32 %v623, %v618
    %v633 = vmul.f32 %v627, %v616
    %v634 = vadd.f32 %v599, %v630
    %v635 = vadd.f32 %v600, %v631
    %v636 = vadd.f32 %v601, %v632
    %v637 = vadd.f32 %v602, %v633
    %v638 = vld [vmem:[%s5] sm:$0x3]
    %639 = vrot.lane.b32.xlu0 %v565, 127
    %v640 = vpop.permute.xlu0 %639
    %641 = vrot.lane.b32.xlu0 %v579, 127
    %v642 = vpop.permute.xlu0 %641
    %643 = vrot.lane.b32.xlu0 %v572, 127
    %v644 = vpop.permute.xlu0 %643
    %645 = vrot.lane.b32.xlu0 %v586, 127
    %v646 = vpop.permute.xlu0 %645
    %vm647 = vcmp.lt.s32.totalorder %v613, 127
    %v648 = vsel %vm647, %v640, %v644
    %v649 = vsel %vm647, %v642, %v646
    %v650 = vsel %vm647, %v644, %v640
    %v651 = vsel %vm647, %v646, %v642
    %v653 = vlaneseq
    %v654 = vshrl.u32 %v653, 7
    %v655 = vsub.s32 0, %v654
    %v656 = vrot.slane %v638, %v655
    %v657 = vlaneseq
    %v658 = vshrl.u32 %v657, 7
    %v659 = vsub.s32 1, %v658
    %v660 = vrot.slane %v638, %v659
    %v663 = vmul.f32 %v656, %v648
    %v664 = vmul.f32 %v660, %v650
    %v665 = vmul.f32 %v656, %v649
    %v666 = vmul.f32 %v660, %v651
    %v667 = vadd.f32 %v634, %v663
    %v668 = vadd.f32 %v635, %v664
    %v669 = vadd.f32 %v636, %v665
    %v670 = vadd.f32 %v637, %v666
    %vm671 = vcmp.gt.f32.partialorder %v565, 1e-20
    %vm672 = vcmp.gt.f32.partialorder %v572, 1e-20
    %vm673 = vcmp.gt.f32.partialorder %v579, 1e-20
    %vm674 = vcmp.gt.f32.partialorder %v586, 1e-20
    %v675 = vsel %vm671, %v565, 1.0
    %v676 = vsel %vm672, %v572, 1.0
    %v677 = vsel %vm673, %v579, 1.0
    %v678 = vsel %vm674, %v586, 1.0
    %v679 = vrcp.pop %v675
    %v680 = vrcp.pop %v676
    %v681 = vrcp.pop %v677
    %v682 = vrcp.pop %v678
    %v683 = vmul.f32 %v667, %v679
    %v684 = vmul.f32 %v668, %v680
    %v685 = vmul.f32 %v669, %v681
    %v686 = vmul.f32 %v670, %v682
    %v687 = vmul.f32 %v496, %v683
    %v688 = vmul.f32 %v498, %v684
    %v689 = vmul.f32 %v539, %v683
    %v690 = vmul.f32 %v541, %v684
    %v691 = vmul.f32 %v500, %v685
    %v692 = vmul.f32 %v502, %v686
    %v693 = vmul.f32 %v543, %v685
    %v694 = vmul.f32 %v545, %v686
    %v695 = vpack.c.bf16 %v691, %v687
    %v696 = vpack.c.bf16 %v692, %v688
    %v697 = vpack.c.bf16 %v693, %v689
    %v698 = vpack.c.bf16 %v694, %v690
    %v699 = vld [vmem:[#allocation7] sm:$0xff]
    %v700 = vld [vmem:[#allocation7 + $0x8] sm:$0xff]
    %v701 = vld [vmem:[#allocation7 + $0x10] sm:$0xff]
    %v702 = vld [vmem:[#allocation7 + $0x18] sm:$0xff]
    %v703 = vld [vmem:[#allocation7 + $0x20] sm:$0xff]
    %v704 = vld [vmem:[#allocation7 + $0x28] sm:$0xff]
    %v705 = vld [vmem:[#allocation7 + $0x30] sm:$0xff]
    %v706 = vld [vmem:[#allocation7 + $0x38] sm:$0xff]
    %v707 = vld [vmem:[#allocation7 + $0x40] sm:$0xff]
    %v708 = vld [vmem:[#allocation7 + $0x48] sm:$0xff]
    %v709 = vld [vmem:[#allocation7 + $0x50] sm:$0xff]
    %v710 = vld [vmem:[#allocation7 + $0x58] sm:$0xff]
    %v711 = vld [vmem:[#allocation7 + $0x60] sm:$0xff]
    %v712 = vld [vmem:[#allocation7 + $0x68] sm:$0xff]
    %v713 = vld [vmem:[#allocation7 + $0x70] sm:$0xff]
    %v714 = vld [vmem:[#allocation7 + $0x78] sm:$0xff]
    %v715 = vld [vmem:[#allocation7 + $0x80] sm:$0xff]
    %v716 = vld [vmem:[#allocation7 + $0x88] sm:$0xff]
    %v717 = vld [vmem:[#allocation7 + $0x90] sm:$0xff]
    %v718 = vld [vmem:[#allocation7 + $0x98] sm:$0xff]
    %v719 = vld [vmem:[#allocation7 + $0xa0] sm:$0xff]
    %v720 = vld [vmem:[#allocation7 + $0xa8] sm:$0xff]
    %v721 = vld [vmem:[#allocation7 + $0xb0] sm:$0xff]
    %v722 = vld [vmem:[#allocation7 + $0xb8] sm:$0xff]
    %v723 = vld [vmem:[#allocation7 + $0xc0] sm:$0xff]
    %v724 = vld [vmem:[#allocation7 + $0xc8] sm:$0xff]
    %v725 = vld [vmem:[#allocation7 + $0xd0] sm:$0xff]
    %v726 = vld [vmem:[#allocation7 + $0xd8] sm:$0xff]
    %v727 = vld [vmem:[#allocation7 + $0xe0] sm:$0xff]
    %v728 = vld [vmem:[#allocation7 + $0xe8] sm:$0xff]
    %v729 = vld [vmem:[#allocation7 + $0xf0] sm:$0xff]
    %v730 = vld [vmem:[#allocation7 + $0xf8] sm:$0xff]
    %v731 = vld [vmem:[#allocation7 + $0x100] sm:$0xff]
    %v732 = vld [vmem:[#allocation7 + $0x108] sm:$0xff]
    %v733 = vld [vmem:[#allocation7 + $0x110] sm:$0xff]
    %v734 = vld [vmem:[#allocation7 + $0x118] sm:$0xff]
    %v735 = vld [vmem:[#allocation7 + $0x120] sm:$0xff]
    %v736 = vld [vmem:[#allocation7 + $0x128] sm:$0xff]
    %v737 = vld [vmem:[#allocation7 + $0x130] sm:$0xff]
    %v738 = vld [vmem:[#allocation7 + $0x138] sm:$0xff]
    %v739 = vld [vmem:[#allocation7 + $0x140] sm:$0xff]
    %v740 = vld [vmem:[#allocation7 + $0x148] sm:$0xff]
    %v741 = vld [vmem:[#allocation7 + $0x150] sm:$0xff]
    %v742 = vld [vmem:[#allocation7 + $0x158] sm:$0xff]
    %v743 = vld [vmem:[#allocation7 + $0x160] sm:$0xff]
    %v744 = vld [vmem:[#allocation7 + $0x168] sm:$0xff]
    %v745 = vld [vmem:[#allocation7 + $0x170] sm:$0xff]
    %v746 = vld [vmem:[#allocation7 + $0x178] sm:$0xff]
    %v747 = vld [vmem:[#allocation7 + $0x180] sm:$0xff]
    %v748 = vld [vmem:[#allocation7 + $0x188] sm:$0xff]
    %v749 = vld [vmem:[#allocation7 + $0x190] sm:$0xff]
    %v750 = vld [vmem:[#allocation7 + $0x198] sm:$0xff]
    %v751 = vld [vmem:[#allocation7 + $0x1a0] sm:$0xff]
    %v752 = vld [vmem:[#allocation7 + $0x1a8] sm:$0xff]
    %v753 = vld [vmem:[#allocation7 + $0x1b0] sm:$0xff]
    %v754 = vld [vmem:[#allocation7 + $0x1b8] sm:$0xff]
    %v755 = vld [vmem:[#allocation7 + $0x1c0] sm:$0xff]
    %v756 = vld [vmem:[#allocation7 + $0x1c8] sm:$0xff]
    %v757 = vld [vmem:[#allocation7 + $0x1d0] sm:$0xff]
    %v758 = vld [vmem:[#allocation7 + $0x1d8] sm:$0xff]
    %v759 = vld [vmem:[#allocation7 + $0x1e0] sm:$0xff]
    %v760 = vld [vmem:[#allocation7 + $0x1e8] sm:$0xff]
    %v761 = vld [vmem:[#allocation7 + $0x1f0] sm:$0xff]
    %v762 = vld [vmem:[#allocation7 + $0x1f8] sm:$0xff]
    %v827 = vunpack.c.l.b16 %v699
    %v828 = vunpack.c.h.b16 %v699
    %v829 = vunpack.c.l.b16 %v700
    %v830 = vunpack.c.h.b16 %v700
    %v831 = vunpack.c.l.b16 %v701
    %v832 = vunpack.c.h.b16 %v701
    %v833 = vunpack.c.l.b16 %v702
    %v834 = vunpack.c.h.b16 %v702
    %v835 = vunpack.c.l.b16 %v703
    %v836 = vunpack.c.h.b16 %v703
    %v837 = vunpack.c.l.b16 %v704
    %v838 = vunpack.c.h.b16 %v704
    %v839 = vunpack.c.l.b16 %v705
    %v840 = vunpack.c.h.b16 %v705
    %v841 = vunpack.c.l.b16 %v706
    %v842 = vunpack.c.h.b16 %v706
    %v843 = vunpack.c.l.b16 %v707
    %v844 = vunpack.c.h.b16 %v707
    %v845 = vunpack.c.l.b16 %v708
    %v846 = vunpack.c.h.b16 %v708
    %v847 = vunpack.c.l.b16 %v709
    %v848 = vunpack.c.h.b16 %v709
    %v849 = vunpack.c.l.b16 %v710
    %v850 = vunpack.c.h.b16 %v710
    %v851 = vunpack.c.l.b16 %v711
    %v852 = vunpack.c.h.b16 %v711
    %v853 = vunpack.c.l.b16 %v712
    %v854 = vunpack.c.h.b16 %v712
    %v855 = vunpack.c.l.b16 %v713
    %v856 = vunpack.c.h.b16 %v713
    %v857 = vunpack.c.l.b16 %v714
    %v858 = vunpack.c.h.b16 %v714
    %v859 = vunpack.c.l.b16 %v715
    %v860 = vunpack.c.h.b16 %v715
    %v861 = vunpack.c.l.b16 %v716
    %v862 = vunpack.c.h.b16 %v716
    %v863 = vunpack.c.l.b16 %v717
    %v864 = vunpack.c.h.b16 %v717
    %v865 = vunpack.c.l.b16 %v718
    %v866 = vunpack.c.h.b16 %v718
    %v867 = vunpack.c.l.b16 %v719
    %v868 = vunpack.c.h.b16 %v719
    %v869 = vunpack.c.l.b16 %v720
    %v870 = vunpack.c.h.b16 %v720
    %v871 = vunpack.c.l.b16 %v721
    %v872 = vunpack.c.h.b16 %v721
    %v873 = vunpack.c.l.b16 %v722
    %v874 = vunpack.c.h.b16 %v722
    %v875 = vunpack.c.l.b16 %v723
    %v876 = vunpack.c.h.b16 %v723
    %v877 = vunpack.c.l.b16 %v724
    %v878 = vunpack.c.h.b16 %v724
    %v879 = vunpack.c.l.b16 %v725
    %v880 = vunpack.c.h.b16 %v725
    %v881 = vunpack.c.l.b16 %v726
    %v882 = vunpack.c.h.b16 %v726
    %v883 = vunpack.c.l.b16 %v727
    %v884 = vunpack.c.h.b16 %v727
    %v885 = vunpack.c.l.b16 %v728
    %v886 = vunpack.c.h.b16 %v728
    %v887 = vunpack.c.l.b16 %v729
    %v888 = vunpack.c.h.b16 %v729
    %v889 = vunpack.c.l.b16 %v730
    %v890 = vunpack.c.h.b16 %v730
    %v891 = vunpack.c.l.b16 %v731
    %v892 = vunpack.c.h.b16 %v731
    %v893 = vunpack.c.l.b16 %v732
    %v894 = vunpack.c.h.b16 %v732
    %v895 = vunpack.c.l.b16 %v733
    %v896 = vunpack.c.h.b16 %v733
    %v897 = vunpack.c.l.b16 %v734
    %v898 = vunpack.c.h.b16 %v734
    %v899 = vunpack.c.l.b16 %v735
    %v900 = vunpack.c.h.b16 %v735
    %v901 = vunpack.c.l.b16 %v736
    %v902 = vunpack.c.h.b16 %v736
    %v903 = vunpack.c.l.b16 %v737
    %v904 = vunpack.c.h.b16 %v737
    %v905 = vunpack.c.l.b16 %v738
    %v906 = vunpack.c.h.b16 %v738
    %v907 = vunpack.c.l.b16 %v739
    %v908 = vunpack.c.h.b16 %v739
    %v909 = vunpack.c.l.b16 %v740
    %v910 = vunpack.c.h.b16 %v740
    %v911 = vunpack.c.l.b16 %v741
    %v912 = vunpack.c.h.b16 %v741
    %v913 = vunpack.c.l.b16 %v742
    %v914 = vunpack.c.h.b16 %v742
    %v915 = vunpack.c.l.b16 %v743
    %v916 = vunpack.c.h.b16 %v743
    %v917 = vunpack.c.l.b16 %v744
    %v918 = vunpack.c.h.b16 %v744
    %v919 = vunpack.c.l.b16 %v745
    %v920 = vunpack.c.h.b16 %v745
    %v921 = vunpack.c.l.b16 %v746
    %v922 = vunpack.c.h.b16 %v746
    %v923 = vunpack.c.l.b16 %v747
    %v924 = vunpack.c.h.b16 %v747
    %v925 = vunpack.c.l.b16 %v748
    %v926 = vunpack.c.h.b16 %v748
    %v927 = vunpack.c.l.b16 %v749
    %v928 = vunpack.c.h.b16 %v749
    %v929 = vunpack.c.l.b16 %v750
    %v930 = vunpack.c.h.b16 %v750
    %v931 = vunpack.c.l.b16 %v751
    %v932 = vunpack.c.h.b16 %v751
    %v933 = vunpack.c.l.b16 %v752
    %v934 = vunpack.c.h.b16 %v752
    %v935 = vunpack.c.l.b16 %v753
    %v936 = vunpack.c.h.b16 %v753
    %v937 = vunpack.c.l.b16 %v754
    %v938 = vunpack.c.h.b16 %v754
    %v939 = vunpack.c.l.b16 %v755
    %v940 = vunpack.c.h.b16 %v755
    %v941 = vunpack.c.l.b16 %v756
    %v942 = vunpack.c.h.b16 %v756
    %v943 = vunpack.c.l.b16 %v757
    %v944 = vunpack.c.h.b16 %v757
    %v945 = vunpack.c.l.b16 %v758
    %v946 = vunpack.c.h.b16 %v758
    %v947 = vunpack.c.l.b16 %v759
    %v948 = vunpack.c.h.b16 %v759
    %v949 = vunpack.c.l.b16 %v760
    %v950 = vunpack.c.h.b16 %v760
    %v951 = vunpack.c.l.b16 %v761
    %v952 = vunpack.c.h.b16 %v761
    %v953 = vunpack.c.l.b16 %v762
    %v954 = vunpack.c.h.b16 %v762
    %v955 = vpack.c.b16 %v829, %v827
    %v956 = vpack.c.b16 %v830, %v828
    %v957 = vpack.c.b16 %v833, %v831
    %v958 = vpack.c.b16 %v834, %v832
    %v959 = vpack.c.b16 %v837, %v835
    %v960 = vpack.c.b16 %v838, %v836
    %v961 = vpack.c.b16 %v841, %v839
    %v962 = vpack.c.b16 %v842, %v840
    %v963 = vpack.c.b16 %v845, %v843
    %v964 = vpack.c.b16 %v846, %v844
    %v965 = vpack.c.b16 %v849, %v847
    %v966 = vpack.c.b16 %v850, %v848
    %v967 = vpack.c.b16 %v853, %v851
    %v968 = vpack.c.b16 %v854, %v852
    %v969 = vpack.c.b16 %v857, %v855
    %v970 = vpack.c.b16 %v858, %v856
    %v971 = vpack.c.b16 %v861, %v859
    %v972 = vpack.c.b16 %v862, %v860
    %v973 = vpack.c.b16 %v865, %v863
    %v974 = vpack.c.b16 %v866, %v864
    %v975 = vpack.c.b16 %v869, %v867
    %v976 = vpack.c.b16 %v870, %v868
    %v977 = vpack.c.b16 %v873, %v871
    %v978 = vpack.c.b16 %v874, %v872
    %v979 = vpack.c.b16 %v877, %v875
    %v980 = vpack.c.b16 %v878, %v876
    %v981 = vpack.c.b16 %v881, %v879
    %v982 = vpack.c.b16 %v882, %v880
    %v983 = vpack.c.b16 %v885, %v883
    %v984 = vpack.c.b16 %v886, %v884
    %v985 = vpack.c.b16 %v889, %v887
    %v986 = vpack.c.b16 %v890, %v888
    %v987 = vpack.c.b16 %v893, %v891
    %v988 = vpack.c.b16 %v894, %v892
    %v989 = vpack.c.b16 %v897, %v895
    %v990 = vpack.c.b16 %v898, %v896
    %v991 = vpack.c.b16 %v901, %v899
    %v992 = vpack.c.b16 %v902, %v900
    %v993 = vpack.c.b16 %v905, %v903
    %v994 = vpack.c.b16 %v906, %v904
    %v995 = vpack.c.b16 %v909, %v907
    %v996 = vpack.c.b16 %v910, %v908
    %v997 = vpack.c.b16 %v913, %v911
    %v998 = vpack.c.b16 %v914, %v912
    %v999 = vpack.c.b16 %v917, %v915
    %v1000 = vpack.c.b16 %v918, %v916
    %v1001 = vpack.c.b16 %v921, %v919
    %v1002 = vpack.c.b16 %v922, %v920
    %v1003 = vpack.c.b16 %v925, %v923
    %v1004 = vpack.c.b16 %v926, %v924
    %v1005 = vpack.c.b16 %v929, %v927
    %v1006 = vpack.c.b16 %v930, %v928
    %v1007 = vpack.c.b16 %v933, %v931
    %v1008 = vpack.c.b16 %v934, %v932
    %v1009 = vpack.c.b16 %v937, %v935
    %v1010 = vpack.c.b16 %v938, %v936
    %v1011 = vpack.c.b16 %v941, %v939
    %v1012 = vpack.c.b16 %v942, %v940
    %v1013 = vpack.c.b16 %v945, %v943
    %v1014 = vpack.c.b16 %v946, %v944
    %v1015 = vpack.c.b16 %v949, %v947
    %v1016 = vpack.c.b16 %v950, %v948
    %v1017 = vpack.c.b16 %v953, %v951
    %v1018 = vpack.c.b16 %v954, %v952
    %1083 = vmatprep.subr.bf16.mxu0 %v970
    %1084 = vmatpush1.bf16.msra.mxu0 %v969
    %1085 = vmatprep.subr.bf16.mxu0 %v968
    %1086 = vmatpush1.bf16.msra.mxu0 %v967
    %1087 = vmatprep.subr.bf16.mxu0 %v966
    %1088 = vmatpush1.bf16.msra.mxu0 %v965
    %1089 = vmatprep.subr.bf16.mxu0 %v964
    %1090 = vmatpush1.bf16.msra.mxu0 %v963
    %1091 = vmatprep.subr.bf16.mxu0 %v962
    %1092 = vmatpush1.bf16.msra.mxu0 %v961
    %1093 = vmatprep.subr.bf16.mxu0 %v960
    %1094 = vmatpush1.bf16.msra.mxu0 %v959
    %1095 = vmatprep.subr.bf16.mxu0 %v958
    %1096 = vmatpush1.bf16.msra.mxu0 %v957
    %1097 = vmatprep.subr.bf16.mxu0 %v956
    %1098 = vmatpush1.bf16.msra.mxu0 %v955
    %1099 = vmatprep.subr.bf16.mxu0 %v986
    %1100 = vmatpush2.bf16.msra.mxu0 %v985
    %1101 = vmatprep.subr.bf16.mxu0 %v984
    %1102 = vmatpush2.bf16.msra.mxu0 %v983
    %1103 = vmatprep.subr.bf16.mxu0 %v982
    %1104 = vmatpush2.bf16.msra.mxu0 %v981
    %1105 = vmatprep.subr.bf16.mxu0 %v980
    %1106 = vmatpush2.bf16.msra.mxu0 %v979
    %1107 = vmatprep.subr.bf16.mxu0 %v978
    %1108 = vmatpush2.bf16.msra.mxu0 %v977
    %1109 = vmatprep.subr.bf16.mxu0 %v976
    %1110 = vmatpush2.bf16.msra.mxu0 %v975
    %1111 = vmatprep.subr.bf16.mxu0 %v974
    %1112 = vmatpush2.bf16.msra.mxu0 %v973
    %1113 = vmatprep.subr.bf16.mxu0 %v972
    %1114 = vmatpush2.bf16.msra.mxu0 %v971
    %1115 = vmatprep.mubr.bf16.mxu0 %v696
    %1116 = vmatmul.mubr.bf16.gmra.mxu0 %v695
    %v1117 = vpop.f32.mrf.mxu0
    %v1118 = vadd.f32 0.0, %v1117
    %v1119 = vpop.f32.mrf.mxu0
    %v1120 = vadd.f32 0.0, %v1119
    %v1121 = vpop.f32.mrf.mxu0
    %v1122 = vadd.f32 0.0, %v1121
    %v1123 = vpop.f32.mrf.mxu0
    %v1124 = vadd.f32 0.0, %v1123
    %1125 = vdwg.mxu0
    %1126 = vmatprep.subr.bf16.mxu0 %v1002
    %1127 = vmatpush1.bf16.msra.mxu0 %v1001
    %1128 = vmatprep.subr.bf16.mxu0 %v1000
    %1129 = vmatpush1.bf16.msra.mxu0 %v999
    %1130 = vmatprep.subr.bf16.mxu0 %v998
    %1131 = vmatpush1.bf16.msra.mxu0 %v997
    %1132 = vmatprep.subr.bf16.mxu0 %v996
    %1133 = vmatpush1.bf16.msra.mxu0 %v995
    %1134 = vmatprep.subr.bf16.mxu0 %v994
    %1135 = vmatpush1.bf16.msra.mxu0 %v993
    %1136 = vmatprep.subr.bf16.mxu0 %v992
    %1137 = vmatpush1.bf16.msra.mxu0 %v991
    %1138 = vmatprep.subr.bf16.mxu0 %v990
    %1139 = vmatpush1.bf16.msra.mxu0 %v989
    %1140 = vmatprep.subr.bf16.mxu0 %v988
    %1141 = vmatpush1.bf16.msra.mxu0 %v987
    %1142 = vmatprep.subr.bf16.mxu0 %v1018
    %1143 = vmatpush2.bf16.msra.mxu0 %v1017
    %1144 = vmatprep.subr.bf16.mxu0 %v1016
    %1145 = vmatpush2.bf16.msra.mxu0 %v1015
    %1146 = vmatprep.subr.bf16.mxu0 %v1014
    %1147 = vmatpush2.bf16.msra.mxu0 %v1013
    %1148 = vmatprep.subr.bf16.mxu0 %v1012
    %1149 = vmatpush2.bf16.msra.mxu0 %v1011
    %1150 = vmatprep.subr.bf16.mxu0 %v1010
    %1151 = vmatpush2.bf16.msra.mxu0 %v1009
    %1152 = vmatprep.subr.bf16.mxu0 %v1008
    %1153 = vmatpush2.bf16.msra.mxu0 %v1007
    %1154 = vmatprep.subr.bf16.mxu0 %v1006
    %1155 = vmatpush2.bf16.msra.mxu0 %v1005
    %1156 = vmatprep.subr.bf16.mxu0 %v1004
    %1157 = vmatpush2.bf16.msra.mxu0 %v1003
    %1158 = vmatprep.mubr.bf16.mxu0 %v698
    %1159 = vmatmul.mubr.bf16.gmra.mxu0 %v697
    %v1160 = vpop.f32.mrf.mxu0
    %v1161 = vadd.f32 %v1118, %v1160
    %v1162 = vpop.f32.mrf.mxu0
    %v1163 = vadd.f32 %v1120, %v1162
    %v1164 = vpop.f32.mrf.mxu0
    %v1165 = vadd.f32 %v1122, %v1164
    %v1166 = vpop.f32.mrf.mxu0
    %v1167 = vadd.f32 %v1124, %v1166
    %1168 = vdwg.mxu0
    %1169 = vst [vmem:[#allocation8] sm:$0xff] %v1161
    %1170 = vst [vmem:[#allocation8 + $0x8] sm:$0xff] %v1163
    %1171 = vst [vmem:[#allocation8 + $0x10] sm:$0xff] %v1165
    %1172 = vst [vmem:[#allocation8 + $0x18] sm:$0xff] %v1167
    // Predicated region
    $region38: #{tpu_custom_call.1} parent=1 // pred_check
      _
    $region39: #{tpu_custom_call.1} parent=1 // pred_check_branch
      %1174 = sbr.rel (0) target = $region41
    $region40: #{tpu_custom_call.1} parent=1 // pred_region
      %s1176 = ssub.s32 512, 512
      %1177 = vsyncadd [#allocation4], %s1176
      %s1178 = sshll.u32 [#allocation8], 4
      %s1179 = int_to_ptr.vmem [resolvable:$true] %s1178
      %1184 = dma.vmem_to_hbm [thread:$0]  %s1179, 512, %s6, [#allocation4], 256, 256, 16
    $region41: #{tpu_custom_call.1} parent=1 // pred_fallthru
      _
    // Predicated region
    $region42: #{tpu_custom_call.1} parent=1 // pred_check
      _
    $region43: #{tpu_custom_call.1} parent=1 // pred_check_branch
      %1186 = sbr.rel (0) target = $region45
    $region44: #{tpu_custom_call.1} parent=1 // pred_region
      %1187 = dma.done [#allocation4], 512
    $region45: #{tpu_custom_call.1} parent=1 // pred_fallthru
      _
    %1188 = vsyncpa [#allocation3], 1
    %1189 = vsyncpa [#allocation6], 1
    %1190 = vsyncpa [#allocation4], 1

// kernel: tpu_custom_call.1
$region0: #{tpu_custom_call.1}
  #allocation0 [shape = 'u32[]', space=smem, size = 0x4, offset = 0x4, fixed_abs, tag = 'smem constant byte address 0x4 - core index']
  #allocation1 [shape = 'u32[144,128]{1,0:T(1,128)}', space=vmem, size = 0x12000, scoped, tag = 'internal scratch']
  %s0 = inlined_call_operand.hbm [shape: bf16[16,256], index: 0, kind: input, shape index: {}]
  %s1 = inlined_call_operand.hbm [shape: bf16[256,512], index: 1, kind: input, shape index: {}]
  %s2 = inlined_call_operand.hbm [shape: bf16[512,256], index: 2, kind: input, shape index: {}]
  %s3 = inlined_call_operand.vmem [shape: f32[1,256], index: 3, kind: input, shape index: {}]
  %s4 = inlined_call_operand.vmem [shape: f32[1,256], index: 4, kind: input, shape index: {}]
  %s5 = inlined_call_operand.vmem [shape: f32[1,256], index: 5, kind: input, shape index: {}]
  %s6 = inlined_call_operand.hbm [shape: f32[16,256], index: 6, kind: output, shape index: {}]
  %s7 = sld [smem:[#allocation0]]
  $region46: #{tpu_custom_call.1} parent=0
    _
  %s9 = ssub.s32 1, %s7
  %s10 = scalar_select 0, %s9, %s7
  $region1: #{tpu_custom_call.1} parent=0
    #allocation2 [shape = 'u8[8192]{0}', space=vmem, size = 0x2000, scoped, tag = 'input window, operand 0, single buffered']
    #allocation3 [shape = 's32[1]{0}', space=sflag, size = 0x4, scoped, tag = 'scoped memory for tpu_custom_call.1']
    #allocation4 [shape = 's32[1]{0}', space=sflag, size = 0x4, scoped, tag = 'scoped memory for tpu_custom_call.1']
    #allocation5 [shape = 'u8[262144]{0}', space=vmem, size = 0x40000, scoped, tag = 'input window, operand 1, single buffered']
    #allocation6 [shape = 's32[1]{0}', space=sflag, size = 0x4, scoped, tag = 'scoped memory for tpu_custom_call.1']
    #allocation7 [shape = 'u8[262144]{0}', space=vmem, size = 0x40000, scoped, tag = 'input window, operand 2, single buffered']
    #allocation8 [shape = 'u8[16384]{0}', space=vmem, size = 0x4000, scoped, tag = 'output window, operand 0, single buffered']
    %11 = vsyncpa [#allocation3], 0
    %12 = vsyncpa [#allocation6], 0
    %13 = vsyncpa [#allocation4], 0
    // Predicated region
    $region2: #{tpu_custom_call.1} parent=1 // pred_check
      _
    $region3: #{tpu_custom_call.1} parent=1 // pred_check_branch
      %15 = sbr.rel (0) target = $region5
    $region4: #{tpu_custom_call.1} parent=1 // pred_region
      %s17 = ssub.s32 256, 256
      %18 = vsyncadd [#allocation3], %s17
      %s19 = sshll.u32 [#allocation2], 4
      %s20 = int_to_ptr.vmem [resolvable:$true] %s19
      %25 = dma.hbm_to_vmem [thread:$0]  %s0, 256, %s20, [#allocation3], 128, 128, 8
    $region5: #{tpu_custom_call.1} parent=1 // pred_fallthru
      _
    // Predicated region
    $region6: #{tpu_custom_call.1} parent=1 // pred_check
      _
    $region7: #{tpu_custom_call.1} parent=1 // pred_check_branch
      %27 = sbr.rel (0) target = $region9
    $region8: #{tpu_custom_call.1} parent=1 // pred_region
      %s29 = ssub.s32 8192, 8192
      %30 = vsyncadd [#allocation6], %s29
      %s31 = sshll.u32 [#allocation5], 4
      %s32 = int_to_ptr.vmem [resolvable:$true] %s31
      %37 = dma.hbm_to_vmem [thread:$0]  %s1, 8192, %s32, [#allocation6], 256, 256, 16
    $region9: #{tpu_custom_call.1} parent=1 // pred_fallthru
      _
    // Predicated region
    $region10: #{tpu_custom_call.1} parent=1 // pred_check
      _
    $region11: #{tpu_custom_call.1} parent=1 // pred_check_branch
      %39 = sbr.rel (0) target = $region13
    $region12: #{tpu_custom_call.1} parent=1 // pred_region
      %s41 = ssub.s32 8192, 8192
      %42 = vsyncadd [#allocation6], %s41
      %s43 = sshll.u32 [#allocation7], 4
      %s44 = int_to_ptr.vmem [resolvable:$true] %s43
      %49 = dma.hbm_to_vmem [thread:$0]  %s2, 8192, %s44, [#allocation6], 128, 128, 8
    $region13: #{tpu_custom_call.1} parent=1 // pred_fallthru
      _
    // Predicated region
    $region14: #{tpu_custom_call.1} parent=1 // pred_check
      _
    $region15: #{tpu_custom_call.1} parent=1 // pred_check_branch
      %51 = sbr.rel (0) target = $region17
    $region16: #{tpu_custom_call.1} parent=1 // pred_region
      _
    $region17: #{tpu_custom_call.1} parent=1 // pred_fallthru
      _
    // Predicated region
    $region18: #{tpu_custom_call.1} parent=1 // pred_check
      _
    $region19: #{tpu_custom_call.1} parent=1 // pred_check_branch
      %53 = sbr.rel (0) target = $region21
    $region20: #{tpu_custom_call.1} parent=1 // pred_region
      _
    $region21: #{tpu_custom_call.1} parent=1 // pred_fallthru
      _
    // Predicated region
    $region22: #{tpu_custom_call.1} parent=1 // pred_check
      _
    $region23: #{tpu_custom_call.1} parent=1 // pred_check_branch
      %55 = sbr.rel (0) target = $region25
    $region24: #{tpu_custom_call.1} parent=1 // pred_region
      _
    $region25: #{tpu_custom_call.1} parent=1 // pred_fallthru
      _
    // Predicated region
    $region26: #{tpu_custom_call.1} parent=1 // pred_check
      _
    $region27: #{tpu_custom_call.1} parent=1 // pred_check_branch
      %57 = sbr.rel (0) target = $region29
    $region28: #{tpu_custom_call.1} parent=1 // pred_region
      %58 = dma.done [#allocation3], 256
    $region29: #{tpu_custom_call.1} parent=1 // pred_fallthru
      _
    // Predicated region
    $region30: #{tpu_custom_call.1} parent=1 // pred_check
      _
    $region31: #{tpu_custom_call.1} parent=1 // pred_check_branch
      %60 = sbr.rel (0) target = $region33
    $region32: #{tpu_custom_call.1} parent=1 // pred_region
      %61 = dma.done [#allocation6], 8192
    $region33: #{tpu_custom_call.1} parent=1 // pred_fallthru
      _
    // Predicated region
    $region34: #{tpu_custom_call.1} parent=1 // pred_check
      _
    $region35: #{tpu_custom_call.1} parent=1 // pred_check_branch
      %63 = sbr.rel (0) target = $region37
    $region36: #{tpu_custom_call.1} parent=1 // pred_region
      %64 = dma.done [#allocation6], 8192
    $region37: #{tpu_custom_call.1} parent=1 // pred_fallthru
      _
    %v65 = vld [vmem:[#allocation2] sm:$0xff]
    %v66 = vld [vmem:[#allocation2 + $0x8] sm:$0xff]
    %v67 = vld [vmem:[#allocation5] sm:$0xff]
    %v68 = vld [vmem:[#allocation5 + $0x8] sm:$0xff]
    %v69 = vld [vmem:[#allocation5 + $0x10] sm:$0xff]
    %v70 = vld [vmem:[#allocation5 + $0x18] sm:$0xff]
    %v71 = vld [vmem:[#allocation5 + $0x20] sm:$0xff]
    %v72 = vld [vmem:[#allocation5 + $0x28] sm:$0xff]
    %v73 = vld [vmem:[#allocation5 + $0x30] sm:$0xff]
    %v74 = vld [vmem:[#allocation5 + $0x38] sm:$0xff]
    %v75 = vld [vmem:[#allocation5 + $0x40] sm:$0xff]
    %v76 = vld [vmem:[#allocation5 + $0x48] sm:$0xff]
    %v77 = vld [vmem:[#allocation5 + $0x50] sm:$0xff]
    %v78 = vld [vmem:[#allocation5 + $0x58] sm:$0xff]
    %v79 = vld [vmem:[#allocation5 + $0x60] sm:$0xff]
    %v80 = vld [vmem:[#allocation5 + $0x68] sm:$0xff]
    %v81 = vld [vmem:[#allocation5 + $0x70] sm:$0xff]
    %v82 = vld [vmem:[#allocation5 + $0x78] sm:$0xff]
    %v83 = vld [vmem:[#allocation5 + $0x80] sm:$0xff]
    %v84 = vld [vmem:[#allocation5 + $0x88] sm:$0xff]
    %v85 = vld [vmem:[#allocation5 + $0x90] sm:$0xff]
    %v86 = vld [vmem:[#allocation5 + $0x98] sm:$0xff]
    %v87 = vld [vmem:[#allocation5 + $0xa0] sm:$0xff]
    %v88 = vld [vmem:[#allocation5 + $0xa8] sm:$0xff]
    %v89 = vld [vmem:[#allocation5 + $0xb0] sm:$0xff]
    %v90 = vld [vmem:[#allocation5 + $0xb8] sm:$0xff]
    %v91 = vld [vmem:[#allocation5 + $0xc0] sm:$0xff]
    %v92 = vld [vmem:[#allocation5 + $0xc8] sm:$0xff]
    %v93 = vld [vmem:[#allocation5 + $0xd0] sm:$0xff]
    %v94 = vld [vmem:[#allocation5 + $0xd8] sm:$0xff]
    %v95 = vld [vmem:[#allocation5 + $0xe0] sm:$0xff]
    %v96 = vld [vmem:[#allocation5 + $0xe8] sm:$0xff]
    %v97 = vld [vmem:[#allocation5 + $0xf0] sm:$0xff]
    %v98 = vld [vmem:[#allocation5 + $0xf8] sm:$0xff]
    %v99 = vld [vmem:[#allocation5 + $0x100] sm:$0xff]
    %v100 = vld [vmem:[#allocation5 + $0x108] sm:$0xff]
    %v101 = vld [vmem:[#allocation5 + $0x110] sm:$0xff]
    %v102 = vld [vmem:[#allocation5 + $0x118] sm:$0xff]
    %v103 = vld [vmem:[#allocation5 + $0x120] sm:$0xff]
    %v104 = vld [vmem:[#allocation5 + $0x128] sm:$0xff]
    %v105 = vld [vmem:[#allocation5 + $0x130] sm:$0xff]
    %v106 = vld [vmem:[#allocation5 + $0x138] sm:$0xff]
    %v107 = vld [vmem:[#allocation5 + $0x140] sm:$0xff]
    %v108 = vld [vmem:[#allocation5 + $0x148] sm:$0xff]
    %v109 = vld [vmem:[#allocation5 + $0x150] sm:$0xff]
    %v110 = vld [vmem:[#allocation5 + $0x158] sm:$0xff]
    %v111 = vld [vmem:[#allocation5 + $0x160] sm:$0xff]
    %v112 = vld [vmem:[#allocation5 + $0x168] sm:$0xff]
    %v113 = vld [vmem:[#allocation5 + $0x170] sm:$0xff]
    %v114 = vld [vmem:[#allocation5 + $0x178] sm:$0xff]
    %v115 = vld [vmem:[#allocation5 + $0x180] sm:$0xff]
    %v116 = vld [vmem:[#allocation5 + $0x188] sm:$0xff]
    %v117 = vld [vmem:[#allocation5 + $0x190] sm:$0xff]
    %v118 = vld [vmem:[#allocation5 + $0x198] sm:$0xff]
    %v119 = vld [vmem:[#allocation5 + $0x1a0] sm:$0xff]
    %v120 = vld [vmem:[#allocation5 + $0x1a8] sm:$0xff]
    %v121 = vld [vmem:[#allocation5 + $0x1b0] sm:$0xff]
    %v122 = vld [vmem:[#allocation5 + $0x1b8] sm:$0xff]
    %v123 = vld [vmem:[#allocation5 + $0x1c0] sm:$0xff]
    %v124 = vld [vmem:[#allocation5 + $0x1c8] sm:$0xff]
    %v125 = vld [vmem:[#allocation5 + $0x1d0] sm:$0xff]
    %v126 = vld [vmem:[#allocation5 + $0x1d8] sm:$0xff]
    %v127 = vld [vmem:[#allocation5 + $0x1e0] sm:$0xff]
    %v128 = vld [vmem:[#allocation5 + $0x1e8] sm:$0xff]
    %v129 = vld [vmem:[#allocation5 + $0x1f0] sm:$0xff]
    %v130 = vld [vmem:[#allocation5 + $0x1f8] sm:$0xff]
    %v133 = vunpack.c.l.b16 %v65
    %v134 = vunpack.c.h.b16 %v65
    %v135 = vunpack.c.l.b16 %v66
    %v136 = vunpack.c.h.b16 %v66
    %v137 = vpack.c.b16 %v135, %v133
    %v138 = vpack.c.b16 %v136, %v134
    %v205 = vunpack.c.l.b16 %v67
    %v206 = vunpack.c.h.b16 %v67
    %v207 = vunpack.c.l.b16 %v68
    %v208 = vunpack.c.h.b16 %v68
    %v209 = vunpack.c.l.b16 %v69
    %v210 = vunpack.c.h.b16 %v69
    %v211 = vunpack.c.l.b16 %v70
    %v212 = vunpack.c.h.b16 %v70
    %v213 = vunpack.c.l.b16 %v71
    %v214 = vunpack.c.h.b16 %v71
    %v215 = vunpack.c.l.b16 %v72
    %v216 = vunpack.c.h.b16 %v72
    %v217 = vunpack.c.l.b16 %v73
    %v218 = vunpack.c.h.b16 %v73
    %v219 = vunpack.c.l.b16 %v74
    %v220 = vunpack.c.h.b16 %v74
    %v221 = vunpack.c.l.b16 %v75
    %v222 = vunpack.c.h.b16 %v75
    %v223 = vunpack.c.l.b16 %v76
    %v224 = vunpack.c.h.b16 %v76
    %v225 = vunpack.c.l.b16 %v77
    %v226 = vunpack.c.h.b16 %v77
    %v227 = vunpack.c.l.b16 %v78
    %v228 = vunpack.c.h.b16 %v78
    %v229 = vunpack.c.l.b16 %v79
    %v230 = vunpack.c.h.b16 %v79
    %v231 = vunpack.c.l.b16 %v80
    %v232 = vunpack.c.h.b16 %v80
    %v233 = vunpack.c.l.b16 %v81
    %v234 = vunpack.c.h.b16 %v81
    %v235 = vunpack.c.l.b16 %v82
    %v236 = vunpack.c.h.b16 %v82
    %v237 = vunpack.c.l.b16 %v83
    %v238 = vunpack.c.h.b16 %v83
    %v239 = vunpack.c.l.b16 %v84
    %v240 = vunpack.c.h.b16 %v84
    %v241 = vunpack.c.l.b16 %v85
    %v242 = vunpack.c.h.b16 %v85
    %v243 = vunpack.c.l.b16 %v86
    %v244 = vunpack.c.h.b16 %v86
    %v245 = vunpack.c.l.b16 %v87
    %v246 = vunpack.c.h.b16 %v87
    %v247 = vunpack.c.l.b16 %v88
    %v248 = vunpack.c.h.b16 %v88
    %v249 = vunpack.c.l.b16 %v89
    %v250 = vunpack.c.h.b16 %v89
    %v251 = vunpack.c.l.b16 %v90
    %v252 = vunpack.c.h.b16 %v90
    %v253 = vunpack.c.l.b16 %v91
    %v254 = vunpack.c.h.b16 %v91
    %v255 = vunpack.c.l.b16 %v92
    %v256 = vunpack.c.h.b16 %v92
    %v257 = vunpack.c.l.b16 %v93
    %v258 = vunpack.c.h.b16 %v93
    %v259 = vunpack.c.l.b16 %v94
    %v260 = vunpack.c.h.b16 %v94
    %v261 = vunpack.c.l.b16 %v95
    %v262 = vunpack.c.h.b16 %v95
    %v263 = vunpack.c.l.b16 %v96
    %v264 = vunpack.c.h.b16 %v96
    %v265 = vunpack.c.l.b16 %v97
    %v266 = vunpack.c.h.b16 %v97
    %v267 = vunpack.c.l.b16 %v98
    %v268 = vunpack.c.h.b16 %v98
    %v269 = vunpack.c.l.b16 %v99
    %v270 = vunpack.c.h.b16 %v99
    %v271 = vunpack.c.l.b16 %v100
    %v272 = vunpack.c.h.b16 %v100
    %v273 = vunpack.c.l.b16 %v101
    %v274 = vunpack.c.h.b16 %v101
    %v275 = vunpack.c.l.b16 %v102
    %v276 = vunpack.c.h.b16 %v102
    %v277 = vunpack.c.l.b16 %v103
    %v278 = vunpack.c.h.b16 %v103
    %v279 = vunpack.c.l.b16 %v104
    %v280 = vunpack.c.h.b16 %v104
    %v281 = vunpack.c.l.b16 %v105
    %v282 = vunpack.c.h.b16 %v105
    %v283 = vunpack.c.l.b16 %v106
    %v284 = vunpack.c.h.b16 %v106
    %v285 = vunpack.c.l.b16 %v107
    %v286 = vunpack.c.h.b16 %v107
    %v287 = vunpack.c.l.b16 %v108
    %v288 = vunpack.c.h.b16 %v108
    %v289 = vunpack.c.l.b16 %v109
    %v290 = vunpack.c.h.b16 %v109
    %v291 = vunpack.c.l.b16 %v110
    %v292 = vunpack.c.h.b16 %v110
    %v293 = vunpack.c.l.b16 %v111
    %v294 = vunpack.c.h.b16 %v111
    %v295 = vunpack.c.l.b16 %v112
    %v296 = vunpack.c.h.b16 %v112
    %v297 = vunpack.c.l.b16 %v113
    %v298 = vunpack.c.h.b16 %v113
    %v299 = vunpack.c.l.b16 %v114
    %v300 = vunpack.c.h.b16 %v114
    %v301 = vunpack.c.l.b16 %v115
    %v302 = vunpack.c.h.b16 %v115
    %v303 = vunpack.c.l.b16 %v116
    %v304 = vunpack.c.h.b16 %v116
    %v305 = vunpack.c.l.b16 %v117
    %v306 = vunpack.c.h.b16 %v117
    %v307 = vunpack.c.l.b16 %v118
    %v308 = vunpack.c.h.b16 %v118
    %v309 = vunpack.c.l.b16 %v119
    %v310 = vunpack.c.h.b16 %v119
    %v311 = vunpack.c.l.b16 %v120
    %v312 = vunpack.c.h.b16 %v120
    %v313 = vunpack.c.l.b16 %v121
    %v314 = vunpack.c.h.b16 %v121
    %v315 = vunpack.c.l.b16 %v122
    %v316 = vunpack.c.h.b16 %v122
    %v317 = vunpack.c.l.b16 %v123
    %v318 = vunpack.c.h.b16 %v123
    %v319 = vunpack.c.l.b16 %v124
    %v320 = vunpack.c.h.b16 %v124
    %v321 = vunpack.c.l.b16 %v125
    %v322 = vunpack.c.h.b16 %v125
    %v323 = vunpack.c.l.b16 %v126
    %v324 = vunpack.c.h.b16 %v126
    %v325 = vunpack.c.l.b16 %v127
    %v326 = vunpack.c.h.b16 %v127
    %v327 = vunpack.c.l.b16 %v128
    %v328 = vunpack.c.h.b16 %v128
    %v329 = vunpack.c.l.b16 %v129
    %v330 = vunpack.c.h.b16 %v129
    %v331 = vunpack.c.l.b16 %v130
    %v332 = vunpack.c.h.b16 %v130
    %v333 = vpack.c.b16 %v209, %v205
    %v334 = vpack.c.b16 %v210, %v206
    %v335 = vpack.c.b16 %v211, %v207
    %v336 = vpack.c.b16 %v212, %v208
    %v337 = vpack.c.b16 %v217, %v213
    %v338 = vpack.c.b16 %v218, %v214
    %v339 = vpack.c.b16 %v219, %v215
    %v340 = vpack.c.b16 %v220, %v216
    %v341 = vpack.c.b16 %v225, %v221
    %v342 = vpack.c.b16 %v226, %v222
    %v343 = vpack.c.b16 %v227, %v223
    %v344 = vpack.c.b16 %v228, %v224
    %v345 = vpack.c.b16 %v233, %v229
    %v346 = vpack.c.b16 %v234, %v230
    %v347 = vpack.c.b16 %v235, %v231
    %v348 = vpack.c.b16 %v236, %v232
    %v349 = vpack.c.b16 %v241, %v237
    %v350 = vpack.c.b16 %v242, %v238
    %v351 = vpack.c.b16 %v243, %v239
    %v352 = vpack.c.b16 %v244, %v240
    %v353 = vpack.c.b16 %v249, %v245
    %v354 = vpack.c.b16 %v250, %v246
    %v355 = vpack.c.b16 %v251, %v247
    %v356 = vpack.c.b16 %v252, %v248
    %v357 = vpack.c.b16 %v257, %v253
    %v358 = vpack.c.b16 %v258, %v254
    %v359 = vpack.c.b16 %v259, %v255
    %v360 = vpack.c.b16 %v260, %v256
    %v361 = vpack.c.b16 %v265, %v261
    %v362 = vpack.c.b16 %v266, %v262
    %v363 = vpack.c.b16 %v267, %v263
    %v364 = vpack.c.b16 %v268, %v264
    %v365 = vpack.c.b16 %v273, %v269
    %v366 = vpack.c.b16 %v274, %v270
    %v367 = vpack.c.b16 %v275, %v271
    %v368 = vpack.c.b16 %v276, %v272
    %v369 = vpack.c.b16 %v281, %v277
    %v370 = vpack.c.b16 %v282, %v278
    %v371 = vpack.c.b16 %v283, %v279
    %v372 = vpack.c.b16 %v284, %v280
    %v373 = vpack.c.b16 %v289, %v285
    %v374 = vpack.c.b16 %v290, %v286
    %v375 = vpack.c.b16 %v291, %v287
    %v376 = vpack.c.b16 %v292, %v288
    %v377 = vpack.c.b16 %v297, %v293
    %v378 = vpack.c.b16 %v298, %v294
    %v379 = vpack.c.b16 %v299, %v295
    %v380 = vpack.c.b16 %v300, %v296
    %v381 = vpack.c.b16 %v305, %v301
    %v382 = vpack.c.b16 %v306, %v302
    %v383 = vpack.c.b16 %v307, %v303
    %v384 = vpack.c.b16 %v308, %v304
    %v385 = vpack.c.b16 %v313, %v309
    %v386 = vpack.c.b16 %v314, %v310
    %v387 = vpack.c.b16 %v315, %v311
    %v388 = vpack.c.b16 %v316, %v312
    %v389 = vpack.c.b16 %v321, %v317
    %v390 = vpack.c.b16 %v322, %v318
    %v391 = vpack.c.b16 %v323, %v319
    %v392 = vpack.c.b16 %v324, %v320
    %v393 = vpack.c.b16 %v329, %v325
    %v394 = vpack.c.b16 %v330, %v326
    %v395 = vpack.c.b16 %v331, %v327
    %v396 = vpack.c.b16 %v332, %v328
    %461 = vmatprep.subr.bf16.mxu0 %v362
    %462 = vmatpush1.bf16.msra.mxu0 %v361
    %463 = vmatprep.subr.bf16.mxu0 %v358
    %464 = vmatpush1.bf16.msra.mxu0 %v357
    %465 = vmatprep.subr.bf16.mxu0 %v354
    %466 = vmatpush1.bf16.msra.mxu0 %v353
    %467 = vmatprep.subr.bf16.mxu0 %v350
    %468 = vmatpush1.bf16.msra.mxu0 %v349
    %469 = vmatprep.subr.bf16.mxu0 %v346
    %470 = vmatpush1.bf16.msra.mxu0 %v345
    %471 = vmatprep.subr.bf16.mxu0 %v342
    %472 = vmatpush1.bf16.msra.mxu0 %v341
    %473 = vmatprep.subr.bf16.mxu0 %v338
    %474 = vmatpush1.bf16.msra.mxu0 %v337
    %475 = vmatprep.subr.bf16.mxu0 %v334
    %476 = vmatpush1.bf16.msra.mxu0 %v333
    %477 = vmatprep.subr.bf16.mxu0 %v394
    %478 = vmatpush2.bf16.msra.mxu0 %v393
    %479 = vmatprep.subr.bf16.mxu0 %v390
    %480 = vmatpush2.bf16.msra.mxu0 %v389
    %481 = vmatprep.subr.bf16.mxu0 %v386
    %482 = vmatpush2.bf16.msra.mxu0 %v385
    %483 = vmatprep.subr.bf16.mxu0 %v382
    %484 = vmatpush2.bf16.msra.mxu0 %v381
    %485 = vmatprep.subr.bf16.mxu0 %v378
    %486 = vmatpush2.bf16.msra.mxu0 %v377
    %487 = vmatprep.subr.bf16.mxu0 %v374
    %488 = vmatpush2.bf16.msra.mxu0 %v373
    %489 = vmatprep.subr.bf16.mxu0 %v370
    %490 = vmatpush2.bf16.msra.mxu0 %v369
    %491 = vmatprep.subr.bf16.mxu0 %v366
    %492 = vmatpush2.bf16.msra.mxu0 %v365
    %493 = vmatprep.mubr.bf16.mxu0 %v138
    %494 = vmatmul.mubr.bf16.gmra.mxu0 %v137
    %v495 = vpop.f32.mrf.mxu0
    %v496 = vadd.f32 0.0, %v495
    %v497 = vpop.f32.mrf.mxu0
    %v498 = vadd.f32 0.0, %v497
    %v499 = vpop.f32.mrf.mxu0
    %v500 = vadd.f32 0.0, %v499
    %v501 = vpop.f32.mrf.mxu0
    %v502 = vadd.f32 0.0, %v501
    %503 = vdwg.mxu0
    %504 = vmatprep.subr.bf16.mxu0 %v364
    %505 = vmatpush1.bf16.msra.mxu0 %v363
    %506 = vmatprep.subr.bf16.mxu0 %v360
    %507 = vmatpush1.bf16.msra.mxu0 %v359
    %508 = vmatprep.subr.bf16.mxu0 %v356
    %509 = vmatpush1.bf16.msra.mxu0 %v355
    %510 = vmatprep.subr.bf16.mxu0 %v352
    %511 = vmatpush1.bf16.msra.mxu0 %v351
    %512 = vmatprep.subr.bf16.mxu0 %v348
    %513 = vmatpush1.bf16.msra.mxu0 %v347
    %514 = vmatprep.subr.bf16.mxu0 %v344
    %515 = vmatpush1.bf16.msra.mxu0 %v343
    %516 = vmatprep.subr.bf16.mxu0 %v340
    %517 = vmatpush1.bf16.msra.mxu0 %v339
    %518 = vmatprep.subr.bf16.mxu0 %v336
    %519 = vmatpush1.bf16.msra.mxu0 %v335
    %520 = vmatprep.subr.bf16.mxu0 %v396
    %521 = vmatpush2.bf16.msra.mxu0 %v395
    %522 = vmatprep.subr.bf16.mxu0 %v392
    %523 = vmatpush2.bf16.msra.mxu0 %v391
    %524 = vmatprep.subr.bf16.mxu0 %v388
    %525 = vmatpush2.bf16.msra.mxu0 %v387
    %526 = vmatprep.subr.bf16.mxu0 %v384
    %527 = vmatpush2.bf16.msra.mxu0 %v383
    %528 = vmatprep.subr.bf16.mxu0 %v380
    %529 = vmatpush2.bf16.msra.mxu0 %v379
    %530 = vmatprep.subr.bf16.mxu0 %v376
    %531 = vmatpush2.bf16.msra.mxu0 %v375
    %532 = vmatprep.subr.bf16.mxu0 %v372
    %533 = vmatpush2.bf16.msra.mxu0 %v371
    %534 = vmatprep.subr.bf16.mxu0 %v368
    %535 = vmatpush2.bf16.msra.mxu0 %v367
    %536 = vmatprep.mubr.bf16.mxu0 %v138
    %537 = vmatmul.mubr.bf16.gmra.mxu0 %v137
    %v538 = vpop.f32.mrf.mxu0
    %v539 = vadd.f32 0.0, %v538
    %v540 = vpop.f32.mrf.mxu0
    %v541 = vadd.f32 0.0, %v540
    %v542 = vpop.f32.mrf.mxu0
    %v543 = vadd.f32 0.0, %v542
    %v544 = vpop.f32.mrf.mxu0
    %v545 = vadd.f32 0.0, %v544
    %546 = vdwg.mxu0
    %v547 = vmul.f32 %v496, %v496
    %v548 = vmul.f32 %v498, %v498
    %v549 = vmul.f32 %v500, %v500
    %v550 = vmul.f32 %v502, %v502
    %v551 = vmul.f32 %v539, %v539
    %v552 = vmul.f32 %v541, %v541
    %v553 = vmul.f32 %v543, %v543
    %v554 = vmul.f32 %v545, %v545
    %v555 = vadd.f32 %v547, %v551
    %v556 = vadd.f32 %v548, %v552
    %v557 = vadd.f32 %v549, %v553
    %v558 = vadd.f32 %v550, %v554
    %v559 = vrsqrt.pop %v555
    %v560 = vmul.f32 %v555, %v559
    %vm561 = vcmp.eq.f32.partialorder %v555, inf
    %v562 = vsel %vm561, %v555, %v560
    %vm563 = vcmp.eq.f32.partialorder %v555, 0.0
    %v564 = vand.u32 %v555, 2147483648
    %v565 = vsel %vm563, %v564, %v562
    %v566 = vrsqrt.pop %v556
    %v567 = vmul.f32 %v556, %v566
    %vm568 = vcmp.eq.f32.partialorder %v556, inf
    %v569 = vsel %vm568, %v556, %v567
    %vm570 = vcmp.eq.f32.partialorder %v556, 0.0
    %v571 = vand.u32 %v556, 2147483648
    %v572 = vsel %vm570, %v571, %v569
    %v573 = vrsqrt.pop %v557
    %v574 = vmul.f32 %v557, %v573
    %vm575 = vcmp.eq.f32.partialorder %v557, inf
    %v576 = vsel %vm575, %v557, %v574
    %vm577 = vcmp.eq.f32.partialorder %v557, 0.0
    %v578 = vand.u32 %v557, 2147483648
    %v579 = vsel %vm577, %v578, %v576
    %v580 = vrsqrt.pop %v558
    %v581 = vmul.f32 %v558, %v580
    %vm582 = vcmp.eq.f32.partialorder %v558, inf
    %v583 = vsel %vm582, %v558, %v581
    %vm584 = vcmp.eq.f32.partialorder %v558, 0.0
    %v585 = vand.u32 %v558, 2147483648
    %v586 = vsel %vm584, %v585, %v583
    %v587 = vld [vmem:[%s3] sm:$0x3]
    %v589 = vlaneseq
    %v590 = vshrl.u32 %v589, 7
    %v591 = vsub.s32 0, %v590
    %v592 = vrot.slane %v587, %v591
    %v593 = vlaneseq
    %v594 = vshrl.u32 %v593, 7
    %v595 = vsub.s32 1, %v594
    %v596 = vrot.slane %v587, %v595
    %v599 = vmul.f32 %v592, %v565
    %v600 = vmul.f32 %v596, %v572
    %v601 = vmul.f32 %v592, %v579
    %v602 = vmul.f32 %v596, %v586
    %v603 = vld [vmem:[%s4] sm:$0x3]
    %604 = vrot.lane.b32.xlu0 %v565, 1
    %v605 = vpop.permute.xlu0 %604
    %606 = vrot.lane.b32.xlu0 %v579, 1
    %v607 = vpop.permute.xlu0 %606
    %608 = vrot.lane.b32.xlu0 %v572, 1
    %v609 = vpop.permute.xlu0 %608
    %610 = vrot.lane.b32.xlu0 %v586, 1
    %v611 = vpop.permute.xlu0 %610
    %v612 = vlaneseq
    %v613 = vand.u32 %v612, 127
    %vm614 = vcmp.lt.s32.totalorder %v613, 1
    %v615 = vsel %vm614, %v605, %v609
    %v616 = vsel %vm614, %v607, %v611
    %v617 = vsel %vm614, %v609, %v605
    %v618 = vsel %vm614, %v611, %v607
    %v620 = vlaneseq
    %v621 = vshrl.u32 %v620, 7
    %v622 = vsub.s32 0, %v621
    %v623 = vrot.slane %v603, %v622
    %v624 = vlaneseq
    %v625 = vshrl.u32 %v624, 7
    %v626 = vsub.s32 1, %v625
    %v627 = vrot.slane %v603, %v626
    %v630 = vmul.f32 %v623, %v617
    %v631 = vmul.f32 %v627, %v615
    %v632 = vmul.f32 %v623, %v618
    %v633 = vmul.f32 %v627, %v616
    %v634 = vadd.f32 %v599, %v630
    %v635 = vadd.f32 %v600, %v631
    %v636 = vadd.f32 %v601, %v632
    %v637 = vadd.f32 %v602, %v633
    %v638 = vld [vmem:[%s5] sm:$0x3]
    %639 = vrot.lane.b32.xlu0 %v565, 127
    %v640 = vpop.permute.xlu0 %639
    %641 = vrot.lane.b32.xlu0 %v579, 127
    %v642 = vpop.permute.xlu0 %641
    %643 = vrot.lane.b32.xlu0 %v572, 127
    %v644 = vpop.permute.xlu0 %643
    %645 = vrot.lane.b32.xlu0 %v586, 127
    %v646 = vpop.permute.xlu0 %645
    %vm647 = vcmp.lt.s32.totalorder %v613, 127
    %v648 = vsel %vm647, %v640, %v644
    %v649 = vsel %vm647, %v642, %v646
    %v650 = vsel %vm647, %v644, %v640
    %v651 = vsel %vm647, %v646, %v642
    %v653 = vlaneseq
    %v654 = vshrl.u32 %v653, 7
    %v655 = vsub.s32 0, %v654
    %v656 = vrot.slane %v638, %v655
    %v657 = vlaneseq
    %v658 = vshrl.u32 %v657, 7
    %v659 = vsub.s32 1, %v658
    %v660 = vrot.slane %v638, %v659
    %v663 = vmul.f32 %v656, %v648
    %v664 = vmul.f32 %v660, %v650
    %v665 = vmul.f32 %v656, %v649
    %v666 = vmul.f32 %v660, %v651
    %v667 = vadd.f32 %v634, %v663
    %v668 = vadd.f32 %v635, %v664
    %v669 = vadd.f32 %v636, %v665
    %v670 = vadd.f32 %v637, %v666
    %vm671 = vcmp.gt.f32.partialorder %v565, 1e-20
    %vm672 = vcmp.gt.f32.partialorder %v572, 1e-20
    %vm673 = vcmp.gt.f32.partialorder %v579, 1e-20
    %vm674 = vcmp.gt.f32.partialorder %v586, 1e-20
    %v675 = vsel %vm671, %v565, 1.0
    %v676 = vsel %vm672, %v572, 1.0
    %v677 = vsel %vm673, %v579, 1.0
    %v678 = vsel %vm674, %v586, 1.0
    %v679 = vrcp.pop %v675
    %v680 = vrcp.pop %v676
    %v681 = vrcp.pop %v677
    %v682 = vrcp.pop %v678
    %v683 = vmul.f32 %v667, %v679
    %v684 = vmul.f32 %v668, %v680
    %v685 = vmul.f32 %v669, %v681
    %v686 = vmul.f32 %v670, %v682
    %v687 = vmul.f32 %v496, %v683
    %v688 = vmul.f32 %v498, %v684
    %v689 = vmul.f32 %v539, %v683
    %v690 = vmul.f32 %v541, %v684
    %v691 = vmul.f32 %v500, %v685
    %v692 = vmul.f32 %v502, %v686
    %v693 = vmul.f32 %v543, %v685
    %v694 = vmul.f32 %v545, %v686
    %v695 = vpack.c.bf16 %v691, %v687
    %v696 = vpack.c.bf16 %v692, %v688
    %v697 = vpack.c.bf16 %v693, %v689
    %v698 = vpack.c.bf16 %v694, %v690
    %v699 = vld [vmem:[#allocation7] sm:$0xff]
    %v700 = vld [vmem:[#allocation7 + $0x8] sm:$0xff]
    %v701 = vld [vmem:[#allocation7 + $0x10] sm:$0xff]
    %v702 = vld [vmem:[#allocation7 + $0x18] sm:$0xff]
    %v703 = vld [vmem:[#allocation7 + $0x20] sm:$0xff]
    %v704 = vld [vmem:[#allocation7 + $0x28] sm:$0xff]
    %v705 = vld [vmem:[#allocation7 + $0x30] sm:$0xff]
    %v706 = vld [vmem:[#allocation7 + $0x38] sm:$0xff]
    %v707 = vld [vmem:[#allocation7 + $0x40] sm:$0xff]
    %v708 = vld [vmem:[#allocation7 + $0x48] sm:$0xff]
    %v709 = vld [vmem:[#allocation7 + $0x50] sm:$0xff]
    %v710 = vld [vmem:[#allocation7 + $0x58] sm:$0xff]
    %v711 = vld [vmem:[#allocation7 + $0x60] sm:$0xff]
    %v712 = vld [vmem:[#allocation7 + $0x68] sm:$0xff]
    %v713 = vld [vmem:[#allocation7 + $0x70] sm:$0xff]
    %v714 = vld [vmem:[#allocation7 + $0x78] sm:$0xff]
    %v715 = vld [vmem:[#allocation7 + $0x80] sm:$0xff]
    %v716 = vld [vmem:[#allocation7 + $0x88] sm:$0xff]
    %v717 = vld [vmem:[#allocation7 + $0x90] sm:$0xff]
    %v718 = vld [vmem:[#allocation7 + $0x98] sm:$0xff]
    %v719 = vld [vmem:[#allocation7 + $0xa0] sm:$0xff]
    %v720 = vld [vmem:[#allocation7 + $0xa8] sm:$0xff]
    %v721 = vld [vmem:[#allocation7 + $0xb0] sm:$0xff]
    %v722 = vld [vmem:[#allocation7 + $0xb8] sm:$0xff]
    %v723 = vld [vmem:[#allocation7 + $0xc0] sm:$0xff]
    %v724 = vld [vmem:[#allocation7 + $0xc8] sm:$0xff]
    %v725 = vld [vmem:[#allocation7 + $0xd0] sm:$0xff]
    %v726 = vld [vmem:[#allocation7 + $0xd8] sm:$0xff]
    %v727 = vld [vmem:[#allocation7 + $0xe0] sm:$0xff]
    %v728 = vld [vmem:[#allocation7 + $0xe8] sm:$0xff]
    %v729 = vld [vmem:[#allocation7 + $0xf0] sm:$0xff]
    %v730 = vld [vmem:[#allocation7 + $0xf8] sm:$0xff]
    %v731 = vld [vmem:[#allocation7 + $0x100] sm:$0xff]
    %v732 = vld [vmem:[#allocation7 + $0x108] sm:$0xff]
    %v733 = vld [vmem:[#allocation7 + $0x110] sm:$0xff]
    %v734 = vld [vmem:[#allocation7 + $0x118] sm:$0xff]
    %v735 = vld [vmem:[#allocation7 + $0x120] sm:$0xff]
    %v736 = vld [vmem:[#allocation7 + $0x128] sm:$0xff]
    %v737 = vld [vmem:[#allocation7 + $0x130] sm:$0xff]
    %v738 = vld [vmem:[#allocation7 + $0x138] sm:$0xff]
    %v739 = vld [vmem:[#allocation7 + $0x140] sm:$0xff]
    %v740 = vld [vmem:[#allocation7 + $0x148] sm:$0xff]
    %v741 = vld [vmem:[#allocation7 + $0x150] sm:$0xff]
    %v742 = vld [vmem:[#allocation7 + $0x158] sm:$0xff]
    %v743 = vld [vmem:[#allocation7 + $0x160] sm:$0xff]
    %v744 = vld [vmem:[#allocation7 + $0x168] sm:$0xff]
    %v745 = vld [vmem:[#allocation7 + $0x170] sm:$0xff]
    %v746 = vld [vmem:[#allocation7 + $0x178] sm:$0xff]
    %v747 = vld [vmem:[#allocation7 + $0x180] sm:$0xff]
    %v748 = vld [vmem:[#allocation7 + $0x188] sm:$0xff]
    %v749 = vld [vmem:[#allocation7 + $0x190] sm:$0xff]
    %v750 = vld [vmem:[#allocation7 + $0x198] sm:$0xff]
    %v751 = vld [vmem:[#allocation7 + $0x1a0] sm:$0xff]
    %v752 = vld [vmem:[#allocation7 + $0x1a8] sm:$0xff]
    %v753 = vld [vmem:[#allocation7 + $0x1b0] sm:$0xff]
    %v754 = vld [vmem:[#allocation7 + $0x1b8] sm:$0xff]
    %v755 = vld [vmem:[#allocation7 + $0x1c0] sm:$0xff]
    %v756 = vld [vmem:[#allocation7 + $0x1c8] sm:$0xff]
    %v757 = vld [vmem:[#allocation7 + $0x1d0] sm:$0xff]
    %v758 = vld [vmem:[#allocation7 + $0x1d8] sm:$0xff]
    %v759 = vld [vmem:[#allocation7 + $0x1e0] sm:$0xff]
    %v760 = vld [vmem:[#allocation7 + $0x1e8] sm:$0xff]
    %v761 = vld [vmem:[#allocation7 + $0x1f0] sm:$0xff]
    %v762 = vld [vmem:[#allocation7 + $0x1f8] sm:$0xff]
    %v827 = vunpack.c.l.b16 %v699
    %v828 = vunpack.c.h.b16 %v699
    %v829 = vunpack.c.l.b16 %v700
    %v830 = vunpack.c.h.b16 %v700
    %v831 = vunpack.c.l.b16 %v701
    %v832 = vunpack.c.h.b16 %v701
    %v833 = vunpack.c.l.b16 %v702
    %v834 = vunpack.c.h.b16 %v702
    %v835 = vunpack.c.l.b16 %v703
    %v836 = vunpack.c.h.b16 %v703
    %v837 = vunpack.c.l.b16 %v704
    %v838 = vunpack.c.h.b16 %v704
    %v839 = vunpack.c.l.b16 %v705
    %v840 = vunpack.c.h.b16 %v705
    %v841 = vunpack.c.l.b16 %v706
    %v842 = vunpack.c.h.b16 %v706
    %v843 = vunpack.c.l.b16 %v707
    %v844 = vunpack.c.h.b16 %v707
    %v845 = vunpack.c.l.b16 %v708
    %v846 = vunpack.c.h.b16 %v708
    %v847 = vunpack.c.l.b16 %v709
    %v848 = vunpack.c.h.b16 %v709
    %v849 = vunpack.c.l.b16 %v710
    %v850 = vunpack.c.h.b16 %v710
    %v851 = vunpack.c.l.b16 %v711
    %v852 = vunpack.c.h.b16 %v711
    %v853 = vunpack.c.l.b16 %v712
    %v854 = vunpack.c.h.b16 %v712
    %v855 = vunpack.c.l.b16 %v713
    %v856 = vunpack.c.h.b16 %v713
    %v857 = vunpack.c.l.b16 %v714
    %v858 = vunpack.c.h.b16 %v714
    %v859 = vunpack.c.l.b16 %v715
    %v860 = vunpack.c.h.b16 %v715
    %v861 = vunpack.c.l.b16 %v716
    %v862 = vunpack.c.h.b16 %v716
    %v863 = vunpack.c.l.b16 %v717
    %v864 = vunpack.c.h.b16 %v717
    %v865 = vunpack.c.l.b16 %v718
    %v866 = vunpack.c.h.b16 %v718
    %v867 = vunpack.c.l.b16 %v719
    %v868 = vunpack.c.h.b16 %v719
    %v869 = vunpack.c.l.b16 %v720
    %v870 = vunpack.c.h.b16 %v720
    %v871 = vunpack.c.l.b16 %v721
    %v872 = vunpack.c.h.b16 %v721
    %v873 = vunpack.c.l.b16 %v722
    %v874 = vunpack.c.h.b16 %v722
    %v875 = vunpack.c.l.b16 %v723
    %v876 = vunpack.c.h.b16 %v723
    %v877 = vunpack.c.l.b16 %v724
    %v878 = vunpack.c.h.b16 %v724
    %v879 = vunpack.c.l.b16 %v725
    %v880 = vunpack.c.h.b16 %v725
    %v881 = vunpack.c.l.b16 %v726
    %v882 = vunpack.c.h.b16 %v726
    %v883 = vunpack.c.l.b16 %v727
    %v884 = vunpack.c.h.b16 %v727
    %v885 = vunpack.c.l.b16 %v728
    %v886 = vunpack.c.h.b16 %v728
    %v887 = vunpack.c.l.b16 %v729
    %v888 = vunpack.c.h.b16 %v729
    %v889 = vunpack.c.l.b16 %v730
    %v890 = vunpack.c.h.b16 %v730
    %v891 = vunpack.c.l.b16 %v731
    %v892 = vunpack.c.h.b16 %v731
    %v893 = vunpack.c.l.b16 %v732
    %v894 = vunpack.c.h.b16 %v732
    %v895 = vunpack.c.l.b16 %v733
    %v896 = vunpack.c.h.b16 %v733
    %v897 = vunpack.c.l.b16 %v734
    %v898 = vunpack.c.h.b16 %v734
    %v899 = vunpack.c.l.b16 %v735
    %v900 = vunpack.c.h.b16 %v735
    %v901 = vunpack.c.l.b16 %v736
    %v902 = vunpack.c.h.b16 %v736
    %v903 = vunpack.c.l.b16 %v737
    %v904 = vunpack.c.h.b16 %v737
    %v905 = vunpack.c.l.b16 %v738
    %v906 = vunpack.c.h.b16 %v738
    %v907 = vunpack.c.l.b16 %v739
    %v908 = vunpack.c.h.b16 %v739
    %v909 = vunpack.c.l.b16 %v740
    %v910 = vunpack.c.h.b16 %v740
    %v911 = vunpack.c.l.b16 %v741
    %v912 = vunpack.c.h.b16 %v741
    %v913 = vunpack.c.l.b16 %v742
    %v914 = vunpack.c.h.b16 %v742
    %v915 = vunpack.c.l.b16 %v743
    %v916 = vunpack.c.h.b16 %v743
    %v917 = vunpack.c.l.b16 %v744
    %v918 = vunpack.c.h.b16 %v744
    %v919 = vunpack.c.l.b16 %v745
    %v920 = vunpack.c.h.b16 %v745
    %v921 = vunpack.c.l.b16 %v746
    %v922 = vunpack.c.h.b16 %v746
    %v923 = vunpack.c.l.b16 %v747
    %v924 = vunpack.c.h.b16 %v747
    %v925 = vunpack.c.l.b16 %v748
    %v926 = vunpack.c.h.b16 %v748
    %v927 = vunpack.c.l.b16 %v749
    %v928 = vunpack.c.h.b16 %v749
    %v929 = vunpack.c.l.b16 %v750
    %v930 = vunpack.c.h.b16 %v750
    %v931 = vunpack.c.l.b16 %v751
    %v932 = vunpack.c.h.b16 %v751
    %v933 = vunpack.c.l.b16 %v752
    %v934 = vunpack.c.h.b16 %v752
    %v935 = vunpack.c.l.b16 %v753
    %v936 = vunpack.c.h.b16 %v753
    %v937 = vunpack.c.l.b16 %v754
    %v938 = vunpack.c.h.b16 %v754
    %v939 = vunpack.c.l.b16 %v755
    %v940 = vunpack.c.h.b16 %v755
    %v941 = vunpack.c.l.b16 %v756
    %v942 = vunpack.c.h.b16 %v756
    %v943 = vunpack.c.l.b16 %v757
    %v944 = vunpack.c.h.b16 %v757
    %v945 = vunpack.c.l.b16 %v758
    %v946 = vunpack.c.h.b16 %v758
    %v947 = vunpack.c.l.b16 %v759
    %v948 = vunpack.c.h.b16 %v759
    %v949 = vunpack.c.l.b16 %v760
    %v950 = vunpack.c.h.b16 %v760
    %v951 = vunpack.c.l.b16 %v761
    %v952 = vunpack.c.h.b16 %v761
    %v953 = vunpack.c.l.b16 %v762
    %v954 = vunpack.c.h.b16 %v762
    %v955 = vpack.c.b16 %v829, %v827
    %v956 = vpack.c.b16 %v830, %v828
    %v957 = vpack.c.b16 %v833, %v831
    %v958 = vpack.c.b16 %v834, %v832
    %v959 = vpack.c.b16 %v837, %v835
    %v960 = vpack.c.b16 %v838, %v836
    %v961 = vpack.c.b16 %v841, %v839
    %v962 = vpack.c.b16 %v842, %v840
    %v963 = vpack.c.b16 %v845, %v843
    %v964 = vpack.c.b16 %v846, %v844
    %v965 = vpack.c.b16 %v849, %v847
    %v966 = vpack.c.b16 %v850, %v848
    %v967 = vpack.c.b16 %v853, %v851
    %v968 = vpack.c.b16 %v854, %v852
    %v969 = vpack.c.b16 %v857, %v855
    %v970 = vpack.c.b16 %v858, %v856
    %v971 = vpack.c.b16 %v861, %v859
    %v972 = vpack.c.b16 %v862, %v860
    %v973 = vpack.c.b16 %v865, %v863
    %v974 = vpack.c.b16 %v866, %v864
    %v975 = vpack.c.b16 %v869, %v867
    %v976 = vpack.c.b16 %v870, %v868
    %v977 = vpack.c.b16 %v873, %v871
    %v978 = vpack.c.b16 %v874, %v872
    %v979 = vpack.c.b16 %v877, %v875
    %v980 = vpack.c.b16 %v878, %v876
    %v981 = vpack.c.b16 %v881, %v879
    %v982 = vpack.c.b16 %v882, %v880
    %v983 = vpack.c.b16 %v885, %v883
    %v984 = vpack.c.b16 %v886, %v884
    %v985 = vpack.c.b16 %v889, %v887
    %v986 = vpack.c.b16 %v890, %v888
    %v987 = vpack.c.b16 %v893, %v891
    %v988 = vpack.c.b16 %v894, %v892
    %v989 = vpack.c.b16 %v897, %v895
    %v990 = vpack.c.b16 %v898, %v896
    %v991 = vpack.c.b16 %v901, %v899
    %v992 = vpack.c.b16 %v902, %v900
    %v993 = vpack.c.b16 %v905, %v903
    %v994 = vpack.c.b16 %v906, %v904
    %v995 = vpack.c.b16 %v909, %v907
    %v996 = vpack.c.b16 %v910, %v908
    %v997 = vpack.c.b16 %v913, %v911
    %v998 = vpack.c.b16 %v914, %v912
    %v999 = vpack.c.b16 %v917, %v915
    %v1000 = vpack.c.b16 %v918, %v916
    %v1001 = vpack.c.b16 %v921, %v919
    %v1002 = vpack.c.b16 %v922, %v920
    %v1003 = vpack.c.b16 %v925, %v923
    %v1004 = vpack.c.b16 %v926, %v924
    %v1005 = vpack.c.b16 %v929, %v927
    %v1006 = vpack.c.b16 %v930, %v928
    %v1007 = vpack.c.b16 %v933, %v931
    %v1008 = vpack.c.b16 %v934, %v932
    %v1009 = vpack.c.b16 %v937, %v935
    %v1010 = vpack.c.b16 %v938, %v936
    %v1011 = vpack.c.b16 %v941, %v939
    %v1012 = vpack.c.b16 %v942, %v940
    %v1013 = vpack.c.b16 %v945, %v943
    %v1014 = vpack.c.b16 %v946, %v944
    %v1015 = vpack.c.b16 %v949, %v947
    %v1016 = vpack.c.b16 %v950, %v948
    %v1017 = vpack.c.b16 %v953, %v951
    %v1018 = vpack.c.b16 %v954, %v952
    %1083 = vmatprep.subr.bf16.mxu0 %v970
    %1084 = vmatpush1.bf16.msra.mxu0 %v969
    %1085 = vmatprep.subr.bf16.mxu0 %v968
    %1086 = vmatpush1.bf16.msra.mxu0 %v967
    %1087 = vmatprep.subr.bf16.mxu0 %v966
    %1088 = vmatpush1.bf16.msra.mxu0 %v965
    %1089 = vmatprep.subr.bf16.mxu0 %v964
    %1090 = vmatpush1.bf16.msra.mxu0 %v963
    %1091 = vmatprep.subr.bf16.mxu0 %v962
    %1092 = vmatpush1.bf16.msra.mxu0 %v961
    %1093 = vmatprep.subr.bf16.mxu0 %v960
    %1094 = vmatpush1.bf16.msra.mxu0 %v959
    %1095 = vmatprep.subr.bf16.mxu0 %v958
    %1096 = vmatpush1.bf16.msra.mxu0 %v957
    %1097 = vmatprep.subr.bf16.mxu0 %v956
    %1098 = vmatpush1.bf16.msra.mxu0 %v955
    %1099 = vmatprep.subr.bf16.mxu0 %v986
    %1100 = vmatpush2.bf16.msra.mxu0 %v985
    %1101 = vmatprep.subr.bf16.mxu0 %v984
    %1102 = vmatpush2.bf16.msra.mxu0 %v983
    %1103 = vmatprep.subr.bf16.mxu0 %v982
    %1104 = vmatpush2.bf16.msra.mxu0 %v981
    %1105 = vmatprep.subr.bf16.mxu0 %v980
    %1106 = vmatpush2.bf16.msra.mxu0 %v979
    %1107 = vmatprep.subr.bf16.mxu0 %v978
    %1108 = vmatpush2.bf16.msra.mxu0 %v977
    %1109 = vmatprep.subr.bf16.mxu0 %v976
    %1110 = vmatpush2.bf16.msra.mxu0 %v975
    %1111 = vmatprep.subr.bf16.mxu0 %v974
    %1112 = vmatpush2.bf16.msra.mxu0 %v973
    %1113 = vmatprep.subr.bf16.mxu0 %v972
    %1114 = vmatpush2.bf16.msra.mxu0 %v971
    %1115 = vmatprep.mubr.bf16.mxu0 %v696
    %1116 = vmatmul.mubr.bf16.gmra.mxu0 %v695
    %v1117 = vpop.f32.mrf.mxu0
    %v1118 = vadd.f32 0.0, %v1117
    %v1119 = vpop.f32.mrf.mxu0
    %v1120 = vadd.f32 0.0, %v1119
    %v1121 = vpop.f32.mrf.mxu0
    %v1122 = vadd.f32 0.0, %v1121
    %v1123 = vpop.f32.mrf.mxu0
    %v1124 = vadd.f32 0.0, %v1123
    %1125 = vdwg.mxu0
    %1126 = vmatprep.subr.bf16.mxu0 %v1002
    %1127 = vmatpush1.bf16.msra.mxu0 %v1001
    %1128 = vmatprep.subr.bf16.mxu0 %v1000
    %1129 = vmatpush1.bf16.msra.mxu0 %v999
    %1130 = vmatprep.subr.bf16.mxu0 %v998
    %1131 = vmatpush1.bf16.msra.mxu0 %v997
    %1132 = vmatprep.subr.bf16.mxu0 %v996
    %1133 = vmatpush1.bf16.msra.mxu0 %v995
    %1134 = vmatprep.subr.bf16.mxu0 %v994
    %1135 = vmatpush1.bf16.msra.mxu0 %v993
    %1136 = vmatprep.subr.bf16.mxu0 %v992
    %1137 = vmatpush1.bf16.msra.mxu0 %v991
    %1138 = vmatprep.subr.bf16.mxu0 %v990
    %1139 = vmatpush1.bf16.msra.mxu0 %v989
    %1140 = vmatprep.subr.bf16.mxu0 %v988
    %1141 = vmatpush1.bf16.msra.mxu0 %v987
    %1142 = vmatprep.subr.bf16.mxu0 %v1018
    %1143 = vmatpush2.bf16.msra.mxu0 %v1017
    %1144 = vmatprep.subr.bf16.mxu0 %v1016
    %1145 = vmatpush2.bf16.msra.mxu0 %v1015
    %1146 = vmatprep.subr.bf16.mxu0 %v1014
    %1147 = vmatpush2.bf16.msra.mxu0 %v1013
    %1148 = vmatprep.subr.bf16.mxu0 %v1012
    %1149 = vmatpush2.bf16.msra.mxu0 %v1011
    %1150 = vmatprep.subr.bf16.mxu0 %v1010
    %1151 = vmatpush2.bf16.msra.mxu0 %v1009
    %1152 = vmatprep.subr.bf16.mxu0 %v1008
    %1153 = vmatpush2.bf16.msra.mxu0 %v1007
    %1154 = vmatprep.subr.bf16.mxu0 %v1006
    %1155 = vmatpush2.bf16.msra.mxu0 %v1005
    %1156 = vmatprep.subr.bf16.mxu0 %v1004
    %1157 = vmatpush2.bf16.msra.mxu0 %v1003
    %1158 = vmatprep.mubr.bf16.mxu0 %v698
    %1159 = vmatmul.mubr.bf16.gmra.mxu0 %v697
    %v1160 = vpop.f32.mrf.mxu0
    %v1161 = vadd.f32 %v1118, %v1160
    %v1162 = vpop.f32.mrf.mxu0
    %v1163 = vadd.f32 %v1120, %v1162
    %v1164 = vpop.f32.mrf.mxu0
    %v1165 = vadd.f32 %v1122, %v1164
    %v1166 = vpop.f32.mrf.mxu0
    %v1167 = vadd.f32 %v1124, %v1166
    %1168 = vdwg.mxu0
    %1169 = vst [vmem:[#allocation8] sm:$0xff] %v1161
    %1170 = vst [vmem:[#allocation8 + $0x8] sm:$0xff] %v1163
    %1171 = vst [vmem:[#allocation8 + $0x10] sm:$0xff] %v1165
    %1172 = vst [vmem:[#allocation8 + $0x18] sm:$0xff] %v1167
    // Predicated region
    $region38: #{tpu_custom_call.1} parent=1 // pred_check
      _
    $region39: #{tpu_custom_call.1} parent=1 // pred_check_branch
      %1174 = sbr.rel (0) target = $region41
    $region40: #{tpu_custom_call.1} parent=1 // pred_region
      %s1176 = ssub.s32 512, 512
      %1177 = vsyncadd [#allocation4], %s1176
      %s1178 = sshll.u32 [#allocation8], 4
      %s1179 = int_to_ptr.vmem [resolvable:$true] %s1178
      %1184 = dma.vmem_to_hbm [thread:$0]  %s1179, 512, %s6, [#allocation4], 256, 256, 16
    $region41: #{tpu_custom_call.1} parent=1 // pred_fallthru
      _
    // Predicated region
    $region42: #{tpu_custom_call.1} parent=1 // pred_check
      _
    $region43: #{tpu_custom_call.1} parent=1 // pred_check_branch
      %1186 = sbr.rel (0) target = $region45
    $region44: #{tpu_custom_call.1} parent=1 // pred_region
      %1187 = dma.done [#allocation4], 512
    $region45: #{tpu_custom_call.1} parent=1 // pred_fallthru
      _
    %1188 = vsyncpa [#allocation3], 1
    %1189 = vsyncpa [#allocation6], 1
    %1190 = vsyncpa [#allocation4], 1

</llo_original>
